<compile_context>
chip_gen: v7x
topology: tpu7x:2x2x1
jax: 0.10.0
libtpu: 0.0.40
codegen_flags: <defaults>
</compile_context>

<pallas_src>
import functools

import numpy as np
import jax
import jax.numpy as jnp
from jax.experimental import pallas as pl
from jax.experimental.pallas import tpu as pltpu

EPS = 1e-5  # PyTorch BatchNorm1d default eps
_CONV_CFG = [("conv1", 1, 2), ("conv2", 2, 4), ("conv3", 4, 8), ("conv4", 8, 16)]


# --------------------------- one-time parameter packing --------------------------- #
def _conv_mix_matrices(w, p_in):
    """Pack one conv stage's weights into three (16,16) row-mixing matrices.

    Input rows  r_in  = ci * p_in  + p   (input channel, phase mod p_in)
    Output rows r_out = co * p_out + q   (output channel, phase mod p_out)
    version 0: unshifted input, 1: input read at position j-1, 2: at j+1.
    """
    cout, cin, ksz = w.shape
    p_out = p_in // 2
    m = np.zeros((3, 16, 16), np.float32)
    for co in range(cout):
        for q in range(p_out):
            for ci in range(cin):
                for k in range(ksz):
                    t = 2 * q + k - 1          # input position = j*p_in + t
                    d = t // p_in              # -1, 0 or +1 (python floor div)
                    p = t - d * p_in           # phase in [0, p_in)
                    ver = {0: 0, -1: 1, 1: 2}[d]
                    m[ver, co * p_out + q, ci * p_in + p] += w[co, ci, k]
    return m


def prepare_params(params):
    """Host-side, one-time packing of all constant operands (off the hot path)."""
    npp = {k: np.asarray(v) for k, v in params.items()}

    mix, g, bt, grp = [], [], [], []
    p_in = 16
    for name, _cin, cout in _CONV_CFG:
        p_out = p_in // 2
        m3 = _conv_mix_matrices(npp[f"{name}_w"], p_in)            # (3,16,16)
        mix.append(np.concatenate([m3[0], m3[1], m3[2]], axis=0))  # (48,16)
        g.append(np.repeat(npp[f"bn_{name}_g"], p_out).reshape(16, 1))
        bt.append(np.repeat(npp[f"bn_{name}_bt"], p_out).reshape(16, 1))
        # 0/1 "same output channel" grouping matrix for the BN reductions.
        grp.append(np.kron(np.eye(cout, dtype=np.float32),
                           np.ones((p_out, p_out), np.float32)))
        p_in = p_out

    # Lane-dense ln1 weight: W1wide[l, co*32 + f] = ln1_w[co*64 + l, f]  -> (64, 512)
    w1 = npp["ln1_w"].astype(np.float32)
    w1wide = np.ascontiguousarray(
        w1.reshape(16, 64, 32).transpose(1, 0, 2).reshape(64, 512))
    # Block-diagonal channel-select mask (16, 512): sel[co, co'*32+f] = (co == co')
    sel = np.kron(np.eye(16, dtype=np.float32), np.ones((1, 32), np.float32))
    # Channel-fold gather (512, 32): gmat[co*32+f, f'] = (f == f')
    gmat = np.tile(np.eye(32, dtype=np.float32), (16, 1))

    return dict(
        mix=jnp.asarray(np.stack(mix), jnp.float32),     # (4,48,16)
        bn_g=jnp.asarray(np.stack(g), jnp.float32),      # (4,16,1)
        bn_b=jnp.asarray(np.stack(bt), jnp.float32),     # (4,16,1)
        grp=jnp.asarray(np.stack(grp), jnp.float32),     # (4,16,16)
        w1=jnp.asarray(w1wide, jnp.float32),             # (64,512) lane-dense
        sel=jnp.asarray(sel, jnp.float32),               # (16,512)
        gmat=jnp.asarray(gmat, jnp.float32),             # (512,32)
        g_ln=jnp.asarray(npp["bn_ln1_g"].reshape(1, 32), jnp.float32),
        b_ln=jnp.asarray(npp["bn_ln1_bt"].reshape(1, 32), jnp.float32),
        w2=jnp.asarray(npp["ln2_w"].reshape(1, 32), jnp.float32),   # ln2_w^T
        b2=jnp.asarray(npp["ln2_b"].reshape(1, 1), jnp.float32),
    )


# ------------------------------ Pallas kernel ------------------------------- #
def _fused_kernel(a0_ref, mix_ref, g_ref, b_ref, grp_ref,
                  w1_ref, sel_ref, gmat_ref, gln_ref, bln_ref,
                  w2_ref, b2_ref, out_ref, *, batch):
    f32 = jnp.float32
    lanes = batch * 64

    # 0/1 lane masks zeroing the per-batch 64-lane block edges (the conv padding).
    pos = jax.lax.broadcasted_iota(jnp.int32, (16, lanes), 1) % 64
    mask_prev = (pos != 0).astype(f32)    # column j-1 exists inside the block
    mask_next = (pos != 63).astype(f32)   # column j+1 exists inside the block

    a = a0_ref[...]                       # (16, lanes) phase-decomposed input

    # ---- 4x (Conv1d k=4 s=2 p=1 -> train-mode BatchNorm1d) ---- #
    for stage in range(4):
        p_out = 8 >> stage                # output phases: 8, 4, 2, 1
        # One fused mixing push: rows 0:16 = M0@a, 16:32 = M1@a, 32:48 = M2@a.
        u = jnp.dot(mix_ref[stage], a, preferred_element_type=f32)     # (48, lanes)
        y = (u[0:16]
             + mask_prev * pltpu.roll(u[16:32], shift=1, axis=1)            # read j-1
             + mask_next * pltpu.roll(u[32:48], shift=lanes - 1, axis=1))   # read j+1
        # conv bias omitted: per-channel constant, cancels against the BN mean.
        inv_cnt = 1.0 / float(p_out * lanes)          # 1 / (batch * L_out)
        yy = jnp.concatenate([y, y * y], axis=1)                           # (16, 2*lanes)
        gs = jnp.dot(grp_ref[stage], yy, preferred_element_type=f32)       # grouped sums
        mu = jnp.sum(gs[:, :lanes], axis=1, keepdims=True) * inv_cnt
        ey2 = jnp.sum(gs[:, lanes:], axis=1, keepdims=True) * inv_cnt
        var = ey2 - mu * mu
        a = (y - mu) * jax.lax.rsqrt(var + EPS) * g_ref[stage] + b_ref[stage]

    # a[co, b*64 + l] == conv4 activation [b, co, l]; torch flatten order is
    # f = co*64 + l.  ln1 via lane-dense W1wide + channel-select mask + gather.
    vrows = []
    for b in range(batch):
        a_b = a[:, b * 64:(b + 1) * 64]                                   # (16, 64)
        t = jnp.dot(a_b, w1_ref[...], preferred_element_type=f32)         # (16, 512)
        vrows.append(jnp.sum(t * sel_ref[...], axis=0, keepdims=True))    # (1, 512)
    v = jnp.concatenate(vrows, axis=0)                                    # (batch, 512)
    z = jnp.dot(v, gmat_ref[...], preferred_element_type=f32)             # (batch, 32)
    # ln1 bias omitted: constant per feature, cancels against bn_ln1 mean.

    # bn_ln1: train-mode stats over the batch dim.
    mu = jnp.mean(z, axis=0, keepdims=True)
    var = jnp.mean(jnp.square(z - mu), axis=0, keepdims=True)
    z = (z - mu) * jax.lax.rsqrt(var + EPS) * gln_ref[...] + bln_ref[...]

    # ln2 (32 -> 1) as VPU multiply + lane reduce, then exact sigmoid.
    o = jnp.sum(z * w2_ref[...], axis=1, keepdims=True) + b2_ref[...]     # (batch, 1)
    out_ref[...] = 1.0 / (1.0 + jnp.exp(-o))


# --------------------------------- wrapper ---------------------------------- #
@jax.jit
def forward(packed, x):
    batch, length = x.shape
    assert length == 1024, "ln1 expects 16 * (L/16) = 1024 flattened features"
    lanes = batch * 64

    # Phase-decomposed, lane-dense input: a0[p, b*64 + j] = x[b, 16*j + p].
    a0 = x.reshape(batch, 64, 16).transpose(2, 0, 1).reshape(16, lanes)

    return pl.pallas_call(
        functools.partial(_fused_kernel, batch=batch),
        out_shape=jax.ShapeDtypeStruct((batch, 1), jnp.float32),
        # No grid: single-shot call, whole operands live in VMEM (~0.6 MiB),
        # no pointless double-buffering.
    )(a0, packed["mix"], packed["bn_g"], packed["bn_b"], packed["grp"],
      packed["w1"], packed["sel"], packed["gmat"],
      packed["g_ln"], packed["b_ln"], packed["w2"], packed["b2"])


# ----------------------- pure-JAX reference (verification) ------------------ #
def im2col_1d(x_ncl, kernel=4, stride=2, pad=1):
    """Gather-based im2col -- ONLY used by the reference, not by the kernel."""
    bsz, cin, length = x_ncl.shape
    xp = jnp.pad(x_ncl, ((0, 0), (0, 0), (pad, pad)))
    lout = (length + 2 * pad - kernel) // stride + 1
    idx = jnp.arange(lout)[:, None] * stride + jnp.arange(kernel)[None, :]
    patches = xp[:, :, idx]                         # (B, Cin, Lout, K)
    patches = jnp.transpose(patches, (0, 2, 1, 3))  # (B, Lout, Cin, K)
    return patches.reshape(bsz * lout, cin * kernel), lout


def forward_reference(params, x):
    """Exact torch math (including the conv/ln1 biases the kernel drops)."""
    bsz = x.shape[0]
    h = x[:, None, :]
    for name, _cin, cout in _CONV_CFG:
        patches, lout = im2col_1d(h)
        w2 = params[f"{name}_w"].reshape(cout, -1).T
        y = jnp.dot(patches, w2, precision=jax.lax.Precision.HIGHEST) + params[f"{name}_b"]
        mu = jnp.mean(y, axis=0, keepdims=True)
        var = jnp.mean(jnp.square(y - mu), axis=0, keepdims=True)
        y = (y - mu) / jnp.sqrt(var + EPS)
        y = y * params[f"bn_{name}_g"] + params[f"bn_{name}_bt"]
        h = y.reshape(bsz, lout, cout).transpose(0, 2, 1)
    flat = h.reshape(bsz, -1)
    z = jnp.dot(flat, params["ln1_w"], precision=jax.lax.Precision.HIGHEST) + params["ln1_b"]
    mu = jnp.mean(z, axis=0, keepdims=True)
    var = jnp.mean(jnp.square(z - mu), axis=0, keepdims=True)
    z = (z - mu) / jnp.sqrt(var + EPS) * params["bn_ln1_g"] + params["bn_ln1_bt"]
    o = jnp.dot(z, params["ln2_w"], precision=jax.lax.Precision.HIGHEST) + params["ln2_b"]
    return jax.nn.sigmoid(o)


def init_params(key):
    params = {}
    keys = iter(jax.random.split(key, 24))
    for name, cin, cout in _CONV_CFG:
        params[f"{name}_w"] = 0.2 * jax.random.normal(next(keys), (cout, cin, 4), jnp.float32)
        params[f"{name}_b"] = 0.1 * jax.random.normal(next(keys), (cout,), jnp.float32)
        # non-default BN affine params to exercise the scale/shift path
        params[f"bn_{name}_g"] = 1.0 + 0.1 * jax.random.normal(next(keys), (cout,), jnp.float32)
        params[f"bn_{name}_bt"] = 0.1 * jax.random.normal(next(keys), (cout,), jnp.float32)
    params["ln1_w"] = 0.05 * jax.random.normal(next(keys), (1024, 32), jnp.float32)
    params["ln1_b"] = 0.1 * jax.random.normal(next(keys), (32,), jnp.float32)
    params["bn_ln1_g"] = 1.0 + 0.1 * jax.random.normal(next(keys), (32,), jnp.float32)
    params["bn_ln1_bt"] = 0.1 * jax.random.normal(next(keys), (32,), jnp.float32)
    params["ln2_w"] = 0.05 * jax.random.normal(next(keys), (32, 1), jnp.float32)
    params["ln2_b"] = 0.1 * jax.random.normal(next(keys), (1,), jnp.float32)
    return params
    # TODO(synk): BatchNorm running-mean/var buffer updates (a training-time
    # side effect, not part of the returned tensor) are not modeled; the kernel
    # assumes train-mode BN (required for the bias-cancellation trick).


if __name__ == "__main__":
    key = jax.random.PRNGKey(0)
    kp, kx = jax.random.split(key)
    params = init_params(kp)
    # ln1 requires 16 * (L/16) = 1024 flattened features -> L = 1024.
    x = jax.random.normal(kx, (2, 1024), jnp.float32)

    packed = prepare_params(params)          # one-time packing, off the hot path
    out = jax.block_until_ready(forward(packed, x))
    assert out.shape == (2, 1), out.shape

    ref = jax.block_until_ready(forward_reference(params, x))
    np.testing.assert_allclose(np.asarray(out), np.asarray(ref), rtol=2e-2, atol=5e-3)

    print("KERNEL_OK")
</pallas_src>

<mosaic_0001>
module attributes {stable_mosaic.version = 11 : i64} {
  func.func @_fused_kernel(%arg0: memref<16x128xf32, #tpu.memory_space<vmem>>, %arg1: memref<4x48x16xf32, #tpu.memory_space<vmem>>, %arg2: memref<4x16x1xf32, #tpu.memory_space<vmem>>, %arg3: memref<4x16x1xf32, #tpu.memory_space<vmem>>, %arg4: memref<4x16x16xf32, #tpu.memory_space<vmem>>, %arg5: memref<64x512xf32, #tpu.memory_space<vmem>>, %arg6: memref<16x512xf32, #tpu.memory_space<vmem>>, %arg7: memref<512x32xf32, #tpu.memory_space<vmem>>, %arg8: memref<1x32xf32, #tpu.memory_space<vmem>>, %arg9: memref<1x32xf32, #tpu.memory_space<vmem>>, %arg10: memref<1x32xf32, #tpu.memory_space<vmem>>, %arg11: memref<1x1xf32, #tpu.memory_space<vmem>>, %arg12: memref<2x1xf32, #tpu.memory_space<vmem>>) attributes {dimension_semantics = [], scalar_prefetch = 0 : i64, scratch_operands = 0 : i64, tpu.core_type = #tpu.core_type<tc>} {
    %0 = tpu.iota {dimensions = array<i32: 1>} : vector<16x128xi32>
    %c64_i32 = arith.constant 64 : i32
    %c0_i32 = arith.constant 0 : i32
    %1 = arith.cmpi eq, %c64_i32, %c0_i32 : i32
    %c1_i32 = arith.constant 1 : i32
    %2 = arith.select %1, %c1_i32, %c64_i32 : i32
    %3 = vector.broadcast %2 : i32 to vector<16x128xi32>
    %4 = arith.remsi %0, %3 : vector<16x128xi32>
    %c0_i32_0 = arith.constant 0 : i32
    %5 = vector.broadcast %c0_i32_0 : i32 to vector<16x128xi32>
    %6 = arith.cmpi ne, %4, %5 : vector<16x128xi32>
    %c0_i32_1 = arith.constant 0 : i32
    %7 = vector.broadcast %c0_i32_1 : i32 to vector<16x128xi32>
    %8 = arith.cmpi slt, %4, %7 : vector<16x128xi32>
    %c0_i32_2 = arith.constant 0 : i32
    %9 = arith.cmpi slt, %2, %c0_i32_2 : i32
    %10 = vector.broadcast %9 : i1 to vector<16x128xi1>
    %11 = vector.broadcast %10 : vector<16x128xi1> to vector<16x128xi1>
    %12 = arith.xori %8, %11 : vector<16x128xi1>
    %13 = arith.andi %12, %6 : vector<16x128xi1>
    %14 = vector.broadcast %2 : i32 to vector<16x128xi32>
    %15 = arith.addi %4, %14 : vector<16x128xi32>
    %16 = arith.select %13, %15, %4 : vector<16x128xi1>, vector<16x128xi32>
    %c0_i32_3 = arith.constant 0 : i32
    %17 = vector.broadcast %c0_i32_3 : i32 to vector<16x128xi32>
    %18 = arith.cmpi ne, %16, %17 : vector<16x128xi32>
    %19 = arith.extui %18 : vector<16x128xi1> to vector<16x128xi32>
    %20 = arith.sitofp %19 : vector<16x128xi32> to vector<16x128xf32>
    %c63_i32 = arith.constant 63 : i32
    %21 = vector.broadcast %c63_i32 : i32 to vector<16x128xi32>
    %22 = arith.cmpi ne, %16, %21 : vector<16x128xi32>
    %23 = arith.extui %22 : vector<16x128xi1> to vector<16x128xi32>
    %24 = arith.sitofp %23 : vector<16x128xi32> to vector<16x128xf32>
    %c0 = arith.constant 0 : index
    %c0_4 = arith.constant 0 : index
    %25 = vector.load %arg0[%c0, %c0_4] : memref<16x128xf32, #tpu.memory_space<vmem>>, vector<16x128xf32>
    %c0_5 = arith.constant 0 : index
    %c0_6 = arith.constant 0 : index
    %c0_7 = arith.constant 0 : index
    %26 = vector.load %arg1[%c0_5, %c0_6, %c0_7] : memref<4x48x16xf32, #tpu.memory_space<vmem>>, vector<1x48x16xf32>
    %27 = vector.shape_cast %26 : vector<1x48x16xf32> to vector<48x16xf32>
    %cst = arith.constant dense<0.000000e+00> : vector<48x128xf32>
    %28 = tpu.matmul %27, %25, %cst {dimension_numbers = #tpu.dot_dimension_numbers<[1], [0], [0], [1], [0, 0, 1, 1], [], []>} : vector<48x16xf32>, vector<16x128xf32>, vector<48x128xf32> -> vector<48x128xf32>
    %29 = vector.extract_strided_slice %28 {offsets = [0, 0], sizes = [16, 128], strides = [1, 1]} : vector<48x128xf32> to vector<16x128xf32>
    %30 = vector.extract_strided_slice %28 {offsets = [16, 0], sizes = [16, 128], strides = [1, 1]} : vector<48x128xf32> to vector<16x128xf32>
    %c1_i32_8 = arith.constant 1 : i32
    %31 = tpu.dynamic_rotate %30 by %c1_i32_8 dim 1 : vector<16x128xf32>, i32 -> vector<16x128xf32>
    %32 = arith.mulf %20, %31 : vector<16x128xf32>
    %33 = arith.addf %29, %32 : vector<16x128xf32>
    %34 = vector.extract_strided_slice %28 {offsets = [32, 0], sizes = [16, 128], strides = [1, 1]} : vector<48x128xf32> to vector<16x128xf32>
    %c127_i32 = arith.constant 127 : i32
    %35 = tpu.dynamic_rotate %34 by %c127_i32 dim 1 : vector<16x128xf32>, i32 -> vector<16x128xf32>
    %36 = arith.mulf %24, %35 : vector<16x128xf32>
    %37 = arith.addf %33, %36 : vector<16x128xf32>
    %38 = arith.mulf %37, %37 : vector<16x128xf32>
    %39 = tpu.concatenate %37, %38 in 1 : vector<16x128xf32>, vector<16x128xf32> -> vector<16x256xf32>
    %c0_9 = arith.constant 0 : index
    %c0_10 = arith.constant 0 : index
    %c0_11 = arith.constant 0 : index
    %40 = vector.load %arg4[%c0_9, %c0_10, %c0_11] : memref<4x16x16xf32, #tpu.memory_space<vmem>>, vector<1x16x16xf32>
    %41 = vector.shape_cast %40 : vector<1x16x16xf32> to vector<16x16xf32>
    %cst_12 = arith.constant dense<0.000000e+00> : vector<16x256xf32>
    %42 = tpu.matmul %41, %39, %cst_12 {dimension_numbers = #tpu.dot_dimension_numbers<[1], [0], [0], [1], [0, 0, 1, 1], [], []>} : vector<16x16xf32>, vector<16x256xf32>, vector<16x256xf32> -> vector<16x256xf32>
    %43 = vector.extract_strided_slice %42 {offsets = [0, 0], sizes = [16, 128], strides = [1, 1]} : vector<16x256xf32> to vector<16x128xf32>
    %cst_13 = arith.constant dense<0.000000e+00> : vector<16xf32>
    %44 = vector.multi_reduction <add>, %43, %cst_13 [1] : vector<16x128xf32> to vector<16xf32>
    %45 = vector.shape_cast %44 : vector<16xf32> to vector<16x1xf32>
    %cst_14 = arith.constant 9.765625E-4 : f32
    %46 = vector.broadcast %cst_14 : f32 to vector<16x1xf32>
    %47 = arith.mulf %45, %46 : vector<16x1xf32>
    %48 = vector.extract_strided_slice %42 {offsets = [0, 128], sizes = [16, 128], strides = [1, 1]} : vector<16x256xf32> to vector<16x128xf32>
    %cst_15 = arith.constant dense<0.000000e+00> : vector<16xf32>
    %49 = vector.multi_reduction <add>, %48, %cst_15 [1] : vector<16x128xf32> to vector<16xf32>
    %50 = vector.shape_cast %49 : vector<16xf32> to vector<16x1xf32>
    %cst_16 = arith.constant 9.765625E-4 : f32
    %51 = vector.broadcast %cst_16 : f32 to vector<16x1xf32>
    %52 = arith.mulf %50, %51 : vector<16x1xf32>
    %53 = arith.mulf %47, %47 : vector<16x1xf32>
    %54 = arith.subf %52, %53 : vector<16x1xf32>
    %55 = vector.broadcast %47 : vector<16x1xf32> to vector<16x128xf32>
    %56 = arith.subf %37, %55 : vector<16x128xf32>
    %cst_17 = arith.constant 9.99999974E-6 : f32
    %57 = vector.broadcast %cst_17 : f32 to vector<16x1xf32>
    %58 = arith.addf %54, %57 : vector<16x1xf32>
    %59 = math.rsqrt %58 : vector<16x1xf32>
    %60 = vector.broadcast %59 : vector<16x1xf32> to vector<16x128xf32>
    %61 = arith.mulf %56, %60 : vector<16x128xf32>
    %c0_18 = arith.constant 0 : index
    %c0_19 = arith.constant 0 : index
    %c0_20 = arith.constant 0 : index
    %62 = vector.load %arg2[%c0_18, %c0_19, %c0_20] : memref<4x16x1xf32, #tpu.memory_space<vmem>>, vector<1x16x1xf32>
    %63 = vector.shape_cast %62 : vector<1x16x1xf32> to vector<16x1xf32>
    %64 = vector.broadcast %63 : vector<16x1xf32> to vector<16x128xf32>
    %65 = arith.mulf %61, %64 : vector<16x128xf32>
    %c0_21 = arith.constant 0 : index
    %c0_22 = arith.constant 0 : index
    %c0_23 = arith.constant 0 : index
    %66 = vector.load %arg3[%c0_21, %c0_22, %c0_23] : memref<4x16x1xf32, #tpu.memory_space<vmem>>, vector<1x16x1xf32>
    %67 = vector.shape_cast %66 : vector<1x16x1xf32> to vector<16x1xf32>
    %68 = vector.broadcast %67 : vector<16x1xf32> to vector<16x128xf32>
    %69 = arith.addf %65, %68 : vector<16x128xf32>
    %c1 = arith.constant 1 : index
    %c0_24 = arith.constant 0 : index
    %c0_25 = arith.constant 0 : index
    %70 = vector.load %arg1[%c1, %c0_24, %c0_25] : memref<4x48x16xf32, #tpu.memory_space<vmem>>, vector<1x48x16xf32>
    %71 = vector.shape_cast %70 : vector<1x48x16xf32> to vector<48x16xf32>
    %cst_26 = arith.constant dense<0.000000e+00> : vector<48x128xf32>
    %72 = tpu.matmul %71, %69, %cst_26 {dimension_numbers = #tpu.dot_dimension_numbers<[1], [0], [0], [1], [0, 0, 1, 1], [], []>} : vector<48x16xf32>, vector<16x128xf32>, vector<48x128xf32> -> vector<48x128xf32>
    %73 = vector.extract_strided_slice %72 {offsets = [0, 0], sizes = [16, 128], strides = [1, 1]} : vector<48x128xf32> to vector<16x128xf32>
    %74 = vector.extract_strided_slice %72 {offsets = [16, 0], sizes = [16, 128], strides = [1, 1]} : vector<48x128xf32> to vector<16x128xf32>
    %c1_i32_27 = arith.constant 1 : i32
    %75 = tpu.dynamic_rotate %74 by %c1_i32_27 dim 1 : vector<16x128xf32>, i32 -> vector<16x128xf32>
    %76 = arith.mulf %20, %75 : vector<16x128xf32>
    %77 = arith.addf %73, %76 : vector<16x128xf32>
    %78 = vector.extract_strided_slice %72 {offsets = [32, 0], sizes = [16, 128], strides = [1, 1]} : vector<48x128xf32> to vector<16x128xf32>
    %c127_i32_28 = arith.constant 127 : i32
    %79 = tpu.dynamic_rotate %78 by %c127_i32_28 dim 1 : vector<16x128xf32>, i32 -> vector<16x128xf32>
    %80 = arith.mulf %24, %79 : vector<16x128xf32>
    %81 = arith.addf %77, %80 : vector<16x128xf32>
    %82 = arith.mulf %81, %81 : vector<16x128xf32>
    %83 = tpu.concatenate %81, %82 in 1 : vector<16x128xf32>, vector<16x128xf32> -> vector<16x256xf32>
    %c1_29 = arith.constant 1 : index
    %c0_30 = arith.constant 0 : index
    %c0_31 = arith.constant 0 : index
    %84 = vector.load %arg4[%c1_29, %c0_30, %c0_31] : memref<4x16x16xf32, #tpu.memory_space<vmem>>, vector<1x16x16xf32>
    %85 = vector.shape_cast %84 : vector<1x16x16xf32> to vector<16x16xf32>
    %cst_32 = arith.constant dense<0.000000e+00> : vector<16x256xf32>
    %86 = tpu.matmul %85, %83, %cst_32 {dimension_numbers = #tpu.dot_dimension_numbers<[1], [0], [0], [1], [0, 0, 1, 1], [], []>} : vector<16x16xf32>, vector<16x256xf32>, vector<16x256xf32> -> vector<16x256xf32>
    %87 = vector.extract_strided_slice %86 {offsets = [0, 0], sizes = [16, 128], strides = [1, 1]} : vector<16x256xf32> to vector<16x128xf32>
    %cst_33 = arith.constant dense<0.000000e+00> : vector<16xf32>
    %88 = vector.multi_reduction <add>, %87, %cst_33 [1] : vector<16x128xf32> to vector<16xf32>
    %89 = vector.shape_cast %88 : vector<16xf32> to vector<16x1xf32>
    %cst_34 = arith.constant 0.001953125 : f32
    %90 = vector.broadcast %cst_34 : f32 to vector<16x1xf32>
    %91 = arith.mulf %89, %90 : vector<16x1xf32>
    %92 = vector.extract_strided_slice %86 {offsets = [0, 128], sizes = [16, 128], strides = [1, 1]} : vector<16x256xf32> to vector<16x128xf32>
    %cst_35 = arith.constant dense<0.000000e+00> : vector<16xf32>
    %93 = vector.multi_reduction <add>, %92, %cst_35 [1] : vector<16x128xf32> to vector<16xf32>
    %94 = vector.shape_cast %93 : vector<16xf32> to vector<16x1xf32>
    %cst_36 = arith.constant 0.001953125 : f32
    %95 = vector.broadcast %cst_36 : f32 to vector<16x1xf32>
    %96 = arith.mulf %94, %95 : vector<16x1xf32>
    %97 = arith.mulf %91, %91 : vector<16x1xf32>
    %98 = arith.subf %96, %97 : vector<16x1xf32>
    %99 = vector.broadcast %91 : vector<16x1xf32> to vector<16x128xf32>
    %100 = arith.subf %81, %99 : vector<16x128xf32>
    %cst_37 = arith.constant 9.99999974E-6 : f32
    %101 = vector.broadcast %cst_37 : f32 to vector<16x1xf32>
    %102 = arith.addf %98, %101 : vector<16x1xf32>
    %103 = math.rsqrt %102 : vector<16x1xf32>
    %104 = vector.broadcast %103 : vector<16x1xf32> to vector<16x128xf32>
    %105 = arith.mulf %100, %104 : vector<16x128xf32>
    %c1_38 = arith.constant 1 : index
    %c0_39 = arith.constant 0 : index
    %c0_40 = arith.constant 0 : index
    %106 = vector.load %arg2[%c1_38, %c0_39, %c0_40] : memref<4x16x1xf32, #tpu.memory_space<vmem>>, vector<1x16x1xf32>
    %107 = vector.shape_cast %106 : vector<1x16x1xf32> to vector<16x1xf32>
    %108 = vector.broadcast %107 : vector<16x1xf32> to vector<16x128xf32>
    %109 = arith.mulf %105, %108 : vector<16x128xf32>
    %c1_41 = arith.constant 1 : index
    %c0_42 = arith.constant 0 : index
    %c0_43 = arith.constant 0 : index
    %110 = vector.load %arg3[%c1_41, %c0_42, %c0_43] : memref<4x16x1xf32, #tpu.memory_space<vmem>>, vector<1x16x1xf32>
    %111 = vector.shape_cast %110 : vector<1x16x1xf32> to vector<16x1xf32>
    %112 = vector.broadcast %111 : vector<16x1xf32> to vector<16x128xf32>
    %113 = arith.addf %109, %112 : vector<16x128xf32>
    %c2 = arith.constant 2 : index
    %c0_44 = arith.constant 0 : index
    %c0_45 = arith.constant 0 : index
    %114 = vector.load %arg1[%c2, %c0_44, %c0_45] : memref<4x48x16xf32, #tpu.memory_space<vmem>>, vector<1x48x16xf32>
    %115 = vector.shape_cast %114 : vector<1x48x16xf32> to vector<48x16xf32>
    %cst_46 = arith.constant dense<0.000000e+00> : vector<48x128xf32>
    %116 = tpu.matmul %115, %113, %cst_46 {dimension_numbers = #tpu.dot_dimension_numbers<[1], [0], [0], [1], [0, 0, 1, 1], [], []>} : vector<48x16xf32>, vector<16x128xf32>, vector<48x128xf32> -> vector<48x128xf32>
    %117 = vector.extract_strided_slice %116 {offsets = [0, 0], sizes = [16, 128], strides = [1, 1]} : vector<48x128xf32> to vector<16x128xf32>
    %118 = vector.extract_strided_slice %116 {offsets = [16, 0], sizes = [16, 128], strides = [1, 1]} : vector<48x128xf32> to vector<16x128xf32>
    %c1_i32_47 = arith.constant 1 : i32
    %119 = tpu.dynamic_rotate %118 by %c1_i32_47 dim 1 : vector<16x128xf32>, i32 -> vector<16x128xf32>
    %120 = arith.mulf %20, %119 : vector<16x128xf32>
    %121 = arith.addf %117, %120 : vector<16x128xf32>
    %122 = vector.extract_strided_slice %116 {offsets = [32, 0], sizes = [16, 128], strides = [1, 1]} : vector<48x128xf32> to vector<16x128xf32>
    %c127_i32_48 = arith.constant 127 : i32
    %123 = tpu.dynamic_rotate %122 by %c127_i32_48 dim 1 : vector<16x128xf32>, i32 -> vector<16x128xf32>
    %124 = arith.mulf %24, %123 : vector<16x128xf32>
    %125 = arith.addf %121, %124 : vector<16x128xf32>
    %126 = arith.mulf %125, %125 : vector<16x128xf32>
    %127 = tpu.concatenate %125, %126 in 1 : vector<16x128xf32>, vector<16x128xf32> -> vector<16x256xf32>
    %c2_49 = arith.constant 2 : index
    %c0_50 = arith.constant 0 : index
    %c0_51 = arith.constant 0 : index
    %128 = vector.load %arg4[%c2_49, %c0_50, %c0_51] : memref<4x16x16xf32, #tpu.memory_space<vmem>>, vector<1x16x16xf32>
    %129 = vector.shape_cast %128 : vector<1x16x16xf32> to vector<16x16xf32>
    %cst_52 = arith.constant dense<0.000000e+00> : vector<16x256xf32>
    %130 = tpu.matmul %129, %127, %cst_52 {dimension_numbers = #tpu.dot_dimension_numbers<[1], [0], [0], [1], [0, 0, 1, 1], [], []>} : vector<16x16xf32>, vector<16x256xf32>, vector<16x256xf32> -> vector<16x256xf32>
    %131 = vector.extract_strided_slice %130 {offsets = [0, 0], sizes = [16, 128], strides = [1, 1]} : vector<16x256xf32> to vector<16x128xf32>
    %cst_53 = arith.constant dense<0.000000e+00> : vector<16xf32>
    %132 = vector.multi_reduction <add>, %131, %cst_53 [1] : vector<16x128xf32> to vector<16xf32>
    %133 = vector.shape_cast %132 : vector<16xf32> to vector<16x1xf32>
    %cst_54 = arith.constant 3.906250e-03 : f32
    %134 = vector.broadcast %cst_54 : f32 to vector<16x1xf32>
    %135 = arith.mulf %133, %134 : vector<16x1xf32>
    %136 = vector.extract_strided_slice %130 {offsets = [0, 128], sizes = [16, 128], strides = [1, 1]} : vector<16x256xf32> to vector<16x128xf32>
    %cst_55 = arith.constant dense<0.000000e+00> : vector<16xf32>
    %137 = vector.multi_reduction <add>, %136, %cst_55 [1] : vector<16x128xf32> to vector<16xf32>
    %138 = vector.shape_cast %137 : vector<16xf32> to vector<16x1xf32>
    %cst_56 = arith.constant 3.906250e-03 : f32
    %139 = vector.broadcast %cst_56 : f32 to vector<16x1xf32>
    %140 = arith.mulf %138, %139 : vector<16x1xf32>
    %141 = arith.mulf %135, %135 : vector<16x1xf32>
    %142 = arith.subf %140, %141 : vector<16x1xf32>
    %143 = vector.broadcast %135 : vector<16x1xf32> to vector<16x128xf32>
    %144 = arith.subf %125, %143 : vector<16x128xf32>
    %cst_57 = arith.constant 9.99999974E-6 : f32
    %145 = vector.broadcast %cst_57 : f32 to vector<16x1xf32>
    %146 = arith.addf %142, %145 : vector<16x1xf32>
    %147 = math.rsqrt %146 : vector<16x1xf32>
    %148 = vector.broadcast %147 : vector<16x1xf32> to vector<16x128xf32>
    %149 = arith.mulf %144, %148 : vector<16x128xf32>
    %c2_58 = arith.constant 2 : index
    %c0_59 = arith.constant 0 : index
    %c0_60 = arith.constant 0 : index
    %150 = vector.load %arg2[%c2_58, %c0_59, %c0_60] : memref<4x16x1xf32, #tpu.memory_space<vmem>>, vector<1x16x1xf32>
    %151 = vector.shape_cast %150 : vector<1x16x1xf32> to vector<16x1xf32>
    %152 = vector.broadcast %151 : vector<16x1xf32> to vector<16x128xf32>
    %153 = arith.mulf %149, %152 : vector<16x128xf32>
    %c2_61 = arith.constant 2 : index
    %c0_62 = arith.constant 0 : index
    %c0_63 = arith.constant 0 : index
    %154 = vector.load %arg3[%c2_61, %c0_62, %c0_63] : memref<4x16x1xf32, #tpu.memory_space<vmem>>, vector<1x16x1xf32>
    %155 = vector.shape_cast %154 : vector<1x16x1xf32> to vector<16x1xf32>
    %156 = vector.broadcast %155 : vector<16x1xf32> to vector<16x128xf32>
    %157 = arith.addf %153, %156 : vector<16x128xf32>
    %c3 = arith.constant 3 : index
    %c0_64 = arith.constant 0 : index
    %c0_65 = arith.constant 0 : index
    %158 = vector.load %arg1[%c3, %c0_64, %c0_65] : memref<4x48x16xf32, #tpu.memory_space<vmem>>, vector<1x48x16xf32>
    %159 = vector.shape_cast %158 : vector<1x48x16xf32> to vector<48x16xf32>
    %cst_66 = arith.constant dense<0.000000e+00> : vector<48x128xf32>
    %160 = tpu.matmul %159, %157, %cst_66 {dimension_numbers = #tpu.dot_dimension_numbers<[1], [0], [0], [1], [0, 0, 1, 1], [], []>} : vector<48x16xf32>, vector<16x128xf32>, vector<48x128xf32> -> vector<48x128xf32>
    %161 = vector.extract_strided_slice %160 {offsets = [0, 0], sizes = [16, 128], strides = [1, 1]} : vector<48x128xf32> to vector<16x128xf32>
    %162 = vector.extract_strided_slice %160 {offsets = [16, 0], sizes = [16, 128], strides = [1, 1]} : vector<48x128xf32> to vector<16x128xf32>
    %c1_i32_67 = arith.constant 1 : i32
    %163 = tpu.dynamic_rotate %162 by %c1_i32_67 dim 1 : vector<16x128xf32>, i32 -> vector<16x128xf32>
    %164 = arith.mulf %20, %163 : vector<16x128xf32>
    %165 = arith.addf %161, %164 : vector<16x128xf32>
    %166 = vector.extract_strided_slice %160 {offsets = [32, 0], sizes = [16, 128], strides = [1, 1]} : vector<48x128xf32> to vector<16x128xf32>
    %c127_i32_68 = arith.constant 127 : i32
    %167 = tpu.dynamic_rotate %166 by %c127_i32_68 dim 1 : vector<16x128xf32>, i32 -> vector<16x128xf32>
    %168 = arith.mulf %24, %167 : vector<16x128xf32>
    %169 = arith.addf %165, %168 : vector<16x128xf32>
    %170 = arith.mulf %169, %169 : vector<16x128xf32>
    %171 = tpu.concatenate %169, %170 in 1 : vector<16x128xf32>, vector<16x128xf32> -> vector<16x256xf32>
    %c3_69 = arith.constant 3 : index
    %c0_70 = arith.constant 0 : index
    %c0_71 = arith.constant 0 : index
    %172 = vector.load %arg4[%c3_69, %c0_70, %c0_71] : memref<4x16x16xf32, #tpu.memory_space<vmem>>, vector<1x16x16xf32>
    %173 = vector.shape_cast %172 : vector<1x16x16xf32> to vector<16x16xf32>
    %cst_72 = arith.constant dense<0.000000e+00> : vector<16x256xf32>
    %174 = tpu.matmul %173, %171, %cst_72 {dimension_numbers = #tpu.dot_dimension_numbers<[1], [0], [0], [1], [0, 0, 1, 1], [], []>} : vector<16x16xf32>, vector<16x256xf32>, vector<16x256xf32> -> vector<16x256xf32>
    %175 = vector.extract_strided_slice %174 {offsets = [0, 0], sizes = [16, 128], strides = [1, 1]} : vector<16x256xf32> to vector<16x128xf32>
    %cst_73 = arith.constant dense<0.000000e+00> : vector<16xf32>
    %176 = vector.multi_reduction <add>, %175, %cst_73 [1] : vector<16x128xf32> to vector<16xf32>
    %177 = vector.shape_cast %176 : vector<16xf32> to vector<16x1xf32>
    %cst_74 = arith.constant 7.812500e-03 : f32
    %178 = vector.broadcast %cst_74 : f32 to vector<16x1xf32>
    %179 = arith.mulf %177, %178 : vector<16x1xf32>
    %180 = vector.extract_strided_slice %174 {offsets = [0, 128], sizes = [16, 128], strides = [1, 1]} : vector<16x256xf32> to vector<16x128xf32>
    %cst_75 = arith.constant dense<0.000000e+00> : vector<16xf32>
    %181 = vector.multi_reduction <add>, %180, %cst_75 [1] : vector<16x128xf32> to vector<16xf32>
    %182 = vector.shape_cast %181 : vector<16xf32> to vector<16x1xf32>
    %cst_76 = arith.constant 7.812500e-03 : f32
    %183 = vector.broadcast %cst_76 : f32 to vector<16x1xf32>
    %184 = arith.mulf %182, %183 : vector<16x1xf32>
    %185 = arith.mulf %179, %179 : vector<16x1xf32>
    %186 = arith.subf %184, %185 : vector<16x1xf32>
    %187 = vector.broadcast %179 : vector<16x1xf32> to vector<16x128xf32>
    %188 = arith.subf %169, %187 : vector<16x128xf32>
    %cst_77 = arith.constant 9.99999974E-6 : f32
    %189 = vector.broadcast %cst_77 : f32 to vector<16x1xf32>
    %190 = arith.addf %186, %189 : vector<16x1xf32>
    %191 = math.rsqrt %190 : vector<16x1xf32>
    %192 = vector.broadcast %191 : vector<16x1xf32> to vector<16x128xf32>
    %193 = arith.mulf %188, %192 : vector<16x128xf32>
    %c3_78 = arith.constant 3 : index
    %c0_79 = arith.constant 0 : index
    %c0_80 = arith.constant 0 : index
    %194 = vector.load %arg2[%c3_78, %c0_79, %c0_80] : memref<4x16x1xf32, #tpu.memory_space<vmem>>, vector<1x16x1xf32>
    %195 = vector.shape_cast %194 : vector<1x16x1xf32> to vector<16x1xf32>
    %196 = vector.broadcast %195 : vector<16x1xf32> to vector<16x128xf32>
    %197 = arith.mulf %193, %196 : vector<16x128xf32>
    %c3_81 = arith.constant 3 : index
    %c0_82 = arith.constant 0 : index
    %c0_83 = arith.constant 0 : index
    %198 = vector.load %arg3[%c3_81, %c0_82, %c0_83] : memref<4x16x1xf32, #tpu.memory_space<vmem>>, vector<1x16x1xf32>
    %199 = vector.shape_cast %198 : vector<1x16x1xf32> to vector<16x1xf32>
    %200 = vector.broadcast %199 : vector<16x1xf32> to vector<16x128xf32>
    %201 = arith.addf %197, %200 : vector<16x128xf32>
    %202 = vector.extract_strided_slice %201 {offsets = [0, 0], sizes = [16, 64], strides = [1, 1]} : vector<16x128xf32> to vector<16x64xf32>
    %c0_84 = arith.constant 0 : index
    %c0_85 = arith.constant 0 : index
    %203 = vector.load %arg5[%c0_84, %c0_85] : memref<64x512xf32, #tpu.memory_space<vmem>>, vector<64x512xf32>
    %cst_86 = arith.constant dense<0.000000e+00> : vector<16x512xf32>
    %204 = tpu.matmul %202, %203, %cst_86 {dimension_numbers = #tpu.dot_dimension_numbers<[1], [0], [0], [1], [0, 0, 1, 1], [], []>} : vector<16x64xf32>, vector<64x512xf32>, vector<16x512xf32> -> vector<16x512xf32>
    %c0_87 = arith.constant 0 : index
    %c0_88 = arith.constant 0 : index
    %205 = vector.load %arg6[%c0_87, %c0_88] : memref<16x512xf32, #tpu.memory_space<vmem>>, vector<16x512xf32>
    %206 = arith.mulf %204, %205 : vector<16x512xf32>
    %cst_89 = arith.constant dense<0.000000e+00> : vector<512xf32>
    %207 = vector.multi_reduction <add>, %206, %cst_89 [0] : vector<16x512xf32> to vector<512xf32>
    %208 = vector.shape_cast %207 : vector<512xf32> to vector<1x512xf32>
    %209 = vector.extract_strided_slice %201 {offsets = [0, 64], sizes = [16, 64], strides = [1, 1]} : vector<16x128xf32> to vector<16x64xf32>
    %c0_90 = arith.constant 0 : index
    %c0_91 = arith.constant 0 : index
    %210 = vector.load %arg5[%c0_90, %c0_91] : memref<64x512xf32, #tpu.memory_space<vmem>>, vector<64x512xf32>
    %cst_92 = arith.constant dense<0.000000e+00> : vector<16x512xf32>
    %211 = tpu.matmul %209, %210, %cst_92 {dimension_numbers = #tpu.dot_dimension_numbers<[1], [0], [0], [1], [0, 0, 1, 1], [], []>} : vector<16x64xf32>, vector<64x512xf32>, vector<16x512xf32> -> vector<16x512xf32>
    %c0_93 = arith.constant 0 : index
    %c0_94 = arith.constant 0 : index
    %212 = vector.load %arg6[%c0_93, %c0_94] : memref<16x512xf32, #tpu.memory_space<vmem>>, vector<16x512xf32>
    %213 = arith.mulf %211, %212 : vector<16x512xf32>
    %cst_95 = arith.constant dense<0.000000e+00> : vector<512xf32>
    %214 = vector.multi_reduction <add>, %213, %cst_95 [0] : vector<16x512xf32> to vector<512xf32>
    %215 = vector.shape_cast %214 : vector<512xf32> to vector<1x512xf32>
    %216 = tpu.concatenate %208, %215 in 0 : vector<1x512xf32>, vector<1x512xf32> -> vector<2x512xf32>
    %c0_96 = arith.constant 0 : index
    %c0_97 = arith.constant 0 : index
    %217 = vector.load %arg7[%c0_96, %c0_97] : memref<512x32xf32, #tpu.memory_space<vmem>>, vector<512x32xf32>
    %cst_98 = arith.constant dense<0.000000e+00> : vector<2x32xf32>
    %218 = tpu.matmul %216, %217, %cst_98 {dimension_numbers = #tpu.dot_dimension_numbers<[1], [0], [0], [1], [0, 0, 1, 1], [], []>} : vector<2x512xf32>, vector<512x32xf32>, vector<2x32xf32> -> vector<2x32xf32>
    %cst_99 = arith.constant dense<0.000000e+00> : vector<32xf32>
    %219 = vector.multi_reduction <add>, %218, %cst_99 [0] : vector<2x32xf32> to vector<32xf32>
    %220 = vector.shape_cast %219 : vector<32xf32> to vector<1x32xf32>
    %cst_100 = arith.constant 2.000000e+00 : f32
    %221 = vector.broadcast %cst_100 : f32 to vector<1x32xf32>
    %222 = arith.divf %220, %221 : vector<1x32xf32>
    %223 = vector.broadcast %222 : vector<1x32xf32> to vector<2x32xf32>
    %224 = arith.subf %218, %223 : vector<2x32xf32>
    %225 = arith.mulf %224, %224 : vector<2x32xf32>
    %cst_101 = arith.constant dense<0.000000e+00> : vector<32xf32>
    %226 = vector.multi_reduction <add>, %225, %cst_101 [0] : vector<2x32xf32> to vector<32xf32>
    %227 = vector.shape_cast %226 : vector<32xf32> to vector<1x32xf32>
    %cst_102 = arith.constant 2.000000e+00 : f32
    %228 = vector.broadcast %cst_102 : f32 to vector<1x32xf32>
    %229 = arith.divf %227, %228 : vector<1x32xf32>
    %230 = vector.broadcast %222 : vector<1x32xf32> to vector<2x32xf32>
    %231 = arith.subf %218, %230 : vector<2x32xf32>
    %cst_103 = arith.constant 9.99999974E-6 : f32
    %232 = vector.broadcast %cst_103 : f32 to vector<1x32xf32>
    %233 = arith.addf %229, %232 : vector<1x32xf32>
    %234 = math.rsqrt %233 : vector<1x32xf32>
    %235 = vector.broadcast %234 : vector<1x32xf32> to vector<2x32xf32>
    %236 = arith.mulf %231, %235 : vector<2x32xf32>
    %c0_104 = arith.constant 0 : index
    %c0_105 = arith.constant 0 : index
    %237 = vector.load %arg8[%c0_104, %c0_105] : memref<1x32xf32, #tpu.memory_space<vmem>>, vector<1x32xf32>
    %238 = vector.broadcast %237 : vector<1x32xf32> to vector<2x32xf32>
    %239 = arith.mulf %236, %238 : vector<2x32xf32>
    %c0_106 = arith.constant 0 : index
    %c0_107 = arith.constant 0 : index
    %240 = vector.load %arg9[%c0_106, %c0_107] : memref<1x32xf32, #tpu.memory_space<vmem>>, vector<1x32xf32>
    %241 = vector.broadcast %240 : vector<1x32xf32> to vector<2x32xf32>
    %242 = arith.addf %239, %241 : vector<2x32xf32>
    %c0_108 = arith.constant 0 : index
    %c0_109 = arith.constant 0 : index
    %243 = vector.load %arg10[%c0_108, %c0_109] : memref<1x32xf32, #tpu.memory_space<vmem>>, vector<1x32xf32>
    %244 = vector.broadcast %243 : vector<1x32xf32> to vector<2x32xf32>
    %245 = arith.mulf %242, %244 : vector<2x32xf32>
    %cst_110 = arith.constant dense<0.000000e+00> : vector<2xf32>
    %246 = vector.multi_reduction <add>, %245, %cst_110 [1] : vector<2x32xf32> to vector<2xf32>
    %247 = vector.shape_cast %246 : vector<2xf32> to vector<2x1xf32>
    %c0_111 = arith.constant 0 : index
    %c0_112 = arith.constant 0 : index
    %248 = vector.load %arg11[%c0_111, %c0_112] : memref<1x1xf32, #tpu.memory_space<vmem>>, vector<1x1xf32>
    %249 = vector.broadcast %248 : vector<1x1xf32> to vector<2x1xf32>
    %250 = arith.addf %247, %249 : vector<2x1xf32>
    %cst_113 = arith.constant 0.000000e+00 : f32
    %251 = vector.broadcast %cst_113 : f32 to vector<2x1xf32>
    %252 = arith.subf %251, %250 : vector<2x1xf32>
    %253 = math.exp %252 : vector<2x1xf32>
    %cst_114 = arith.constant 1.000000e+00 : f32
    %254 = vector.broadcast %cst_114 : f32 to vector<2x1xf32>
    %255 = arith.addf %254, %253 : vector<2x1xf32>
    %cst_115 = arith.constant 1.000000e+00 : f32
    %256 = vector.broadcast %cst_115 : f32 to vector<2x1xf32>
    %257 = arith.divf %256, %255 : vector<2x1xf32>
    %c0_116 = arith.constant 0 : index
    %c0_117 = arith.constant 0 : index
    %258 = vector.load %arg12[%c0_116, %c0_117] : memref<2x1xf32, #tpu.memory_space<vmem>>, vector<2x1xf32>
    tpu.vector_store %arg12[%c0_116, %c0_117], %257 {strides = array<i32>} : memref<2x1xf32, #tpu.memory_space<vmem>>, vector<2x1xf32>,
    return
  }
}

</mosaic_0001>

<llo_original>
// kernel: forward.1
$region0: #{forward.1}
  #allocation0 [shape = 'u32[]', space=smem, size = 0x4, offset = 0x4, fixed_abs, tag = 'smem constant byte address 0x4 - core index']
  #allocation1 [shape = 'u32[144,128]{1,0:T(1,128)}', space=vmem, size = 0x12000, scoped, tag = 'internal scratch']
  #allocation2 [shape = 'f32[1,1]{1,0:T(1,128)S(1)}', space=vmem, size = 0x200, scoped, tag = 'scoped memory for forward.1']
  %s0 = inlined_call_operand.vmem [shape: f32[16,128], index: 0, kind: input, shape index: {}]
  %s1 = inlined_call_operand.vmem [shape: f32[4,48,16], index: 1, kind: input, shape index: {}]
  %s2 = inlined_call_operand.vmem [shape: f32[4,16,1], index: 2, kind: input, shape index: {}]
  %s3 = inlined_call_operand.vmem [shape: f32[4,16,1], index: 3, kind: input, shape index: {}]
  %s4 = inlined_call_operand.vmem [shape: f32[4,16,16], index: 4, kind: input, shape index: {}]
  %s5 = inlined_call_operand.vmem [shape: f32[64,512], index: 5, kind: input, shape index: {}]
  %s6 = inlined_call_operand.vmem [shape: f32[16,512], index: 6, kind: input, shape index: {}]
  %s7 = inlined_call_operand.vmem [shape: f32[512,32], index: 7, kind: input, shape index: {}]
  %s8 = inlined_call_operand.vmem [shape: f32[1,32], index: 8, kind: input, shape index: {}]
  %s9 = inlined_call_operand.vmem [shape: f32[1,32], index: 9, kind: input, shape index: {}]
  %s10 = inlined_call_operand.vmem [shape: f32[1,32], index: 10, kind: input, shape index: {}]
  %s11 = inlined_call_operand.<no memory space> [shape: f32[1,1], index: 11, kind: input, shape index: {}]
  %s12 = inlined_call_operand.vmem [shape: f32[2,1], index: 12, kind: output, shape index: {}]
  %s13 = sld [smem:[#allocation0]]
  $region58: #{forward.1} parent=0
    _
  %s15 = ssub.s32 1, %s13
  %s16 = scalar_select 0, %s15, %s13
  %v17 = vstv %s11
  %18 = vst [vmem:[#allocation2] sm:$0x1] %v17
  // Predicated region
  $region2: #{forward.1} parent=0 // pred_check
    _
  $region3: #{forward.1} parent=0 // pred_check_branch
    %20 = sbr.rel (0) target = $region5
  $region4: #{forward.1} parent=0 // pred_region
    _
  $region5: #{forward.1} parent=0 // pred_fallthru
    _
  // Predicated region
  $region6: #{forward.1} parent=0 // pred_check
    _
  $region7: #{forward.1} parent=0 // pred_check_branch
    %22 = sbr.rel (0) target = $region9
  $region8: #{forward.1} parent=0 // pred_region
    _
  $region9: #{forward.1} parent=0 // pred_fallthru
    _
  // Predicated region
  $region10: #{forward.1} parent=0 // pred_check
    _
  $region11: #{forward.1} parent=0 // pred_check_branch
    %24 = sbr.rel (0) target = $region13
  $region12: #{forward.1} parent=0 // pred_region
    _
  $region13: #{forward.1} parent=0 // pred_fallthru
    _
  // Predicated region
  $region14: #{forward.1} parent=0 // pred_check
    _
  $region15: #{forward.1} parent=0 // pred_check_branch
    %26 = sbr.rel (0) target = $region17
  $region16: #{forward.1} parent=0 // pred_region
    _
  $region17: #{forward.1} parent=0 // pred_fallthru
    _
  // Predicated region
  $region18: #{forward.1} parent=0 // pred_check
    _
  $region19: #{forward.1} parent=0 // pred_check_branch
    %28 = sbr.rel (0) target = $region21
  $region20: #{forward.1} parent=0 // pred_region
    _
  $region21: #{forward.1} parent=0 // pred_fallthru
    _
  // Predicated region
  $region22: #{forward.1} parent=0 // pred_check
    _
  $region23: #{forward.1} parent=0 // pred_check_branch
    %30 = sbr.rel (0) target = $region25
  $region24: #{forward.1} parent=0 // pred_region
    _
  $region25: #{forward.1} parent=0 // pred_fallthru
    _
  // Predicated region
  $region26: #{forward.1} parent=0 // pred_check
    _
  $region27: #{forward.1} parent=0 // pred_check_branch
    %32 = sbr.rel (0) target = $region29
  $region28: #{forward.1} parent=0 // pred_region
    _
  $region29: #{forward.1} parent=0 // pred_fallthru
    _
  // Predicated region
  $region30: #{forward.1} parent=0 // pred_check
    _
  $region31: #{forward.1} parent=0 // pred_check_branch
    %34 = sbr.rel (0) target = $region33
  $region32: #{forward.1} parent=0 // pred_region
    _
  $region33: #{forward.1} parent=0 // pred_fallthru
    _
  // Predicated region
  $region34: #{forward.1} parent=0 // pred_check
    _
  $region35: #{forward.1} parent=0 // pred_check_branch
    %36 = sbr.rel (0) target = $region37
  $region36: #{forward.1} parent=0 // pred_region
    _
  $region37: #{forward.1} parent=0 // pred_fallthru
    _
  // Predicated region
  $region38: #{forward.1} parent=0 // pred_check
    _
  $region39: #{forward.1} parent=0 // pred_check_branch
    %38 = sbr.rel (0) target = $region41
  $region40: #{forward.1} parent=0 // pred_region
    _
  $region41: #{forward.1} parent=0 // pred_fallthru
    _
  // Predicated region
  $region42: #{forward.1} parent=0 // pred_check
    _
  $region43: #{forward.1} parent=0 // pred_check_branch
    %40 = sbr.rel (0) target = $region45
  $region44: #{forward.1} parent=0 // pred_region
    _
  $region45: #{forward.1} parent=0 // pred_fallthru
    _
  // Predicated region
  $region46: #{forward.1} parent=0 // pred_check
    _
  $region47: #{forward.1} parent=0 // pred_check_branch
    %42 = sbr.rel (0) target = $region49
  $region48: #{forward.1} parent=0 // pred_region
    _
  $region49: #{forward.1} parent=0 // pred_fallthru
    _
  %v43 = vlaneseq
  %v44 = vand.u32 %v43, 127
  %vm45 = vcmp.lt.s32.totalorder %v44, 0
  %v46 = vsub.s32 0, %v44
  %v47 = vsel %vm45, %v46, %v44
  %v48 = vshrl.u32 %v47, 6
  %v49 = vand.u32 %v47, 63
  %v50 = vsub.s32 0, %v49
  %v51 = vsel %vm45, %v50, %v49
  %vm52 = vcmp.ne.s32.totalorder %v51, 0
  %vm53 = vcmp.lt.s32.totalorder %v51, 0
  %vm54 = vmand %vm53, %vm52
  %v55 = vadd.s32 %v51, 64
  %v56 = vsel %vm54, %v55, %v51
  %vm57 = vcmp.ne.s32.totalorder %v56, 0
  %v58 = vsel %vm57, 1, 0
  %v59 = vcvt.s32.f32 %v58
  %vm60 = vcmp.ne.s32.totalorder %v56, 63
  %v61 = vsel %vm60, 1, 0
  %v62 = vcvt.s32.f32 %v61
  %v63 = vld [vmem:[%s0] sm:$0xff]
  %v64 = vld [vmem:[%s0 + $0x8] sm:$0xff]
  %v65 = vld [vmem:[%s1] sm:$0xff]
  %v66 = vld [vmem:[%s1 + $0x8] sm:$0xff]
  %v67 = vld [vmem:[%s1 + $0x10] sm:$0xff]
  %v68 = vld [vmem:[%s1 + $0x18] sm:$0xff]
  %v69 = vld [vmem:[%s1 + $0x20] sm:$0xff]
  %v70 = vld [vmem:[%s1 + $0x28] sm:$0xff]
  %vm71 = vcmask 130048
  %v73 = vsel %vm71, %v65, 0
  %v76 = vsel %vm71, %v66, 0
  %v79 = vsel %vm71, %v67, 0
  %v82 = vsel %vm71, %v68, 0
  %v85 = vsel %vm71, %v69, 0
  %v88 = vsel %vm71, %v70, 0
  %90 = vmatprep.subr.mxu0 0.0
  %91 = vmatpush1.msra.mxu0 %v63
  %92 = vmatprep.subr.mxu0 0.0
  %93 = vmatpush1.msra.mxu0 %v64
  %94 = vmatprep.subr.mxu0 0.0
  %95 = vmatpush1.msra.mxu0 0.0
  %96 = vmatprep.subr.mxu0 0.0
  %97 = vmatpush1.msra.mxu0 0.0
  %98 = vmatprep.subr.mxu0 0.0
  %99 = vmatpush1.msra.mxu0 0.0
  %100 = vmatprep.subr.mxu0 0.0
  %101 = vmatpush1.msra.mxu0 0.0
  %102 = vmatprep.subr.mxu0 0.0
  %103 = vmatpush1.msra.mxu0 0.0
  %104 = vmatprep.subr.mxu0 0.0
  %105 = vmatpush1.msra.mxu0 0.0
  %106 = vmatprep.subr.mxu0 0.0
  %107 = vmatpush1.msra.mxu0 0.0
  %108 = vmatprep.subr.mxu0 0.0
  %109 = vmatpush1.msra.mxu0 0.0
  %110 = vmatprep.subr.mxu0 0.0
  %111 = vmatpush1.msra.mxu0 0.0
  %112 = vmatprep.subr.mxu0 0.0
  %113 = vmatpush1.msra.mxu0 0.0
  %114 = vmatprep.subr.mxu0 0.0
  %115 = vmatpush1.msra.mxu0 0.0
  %116 = vmatprep.subr.mxu0 0.0
  %117 = vmatpush1.msra.mxu0 0.0
  %118 = vmatprep.subr.mxu0 0.0
  %119 = vmatpush1.msra.mxu0 0.0
  %120 = vmatprep.subr.mxu0 0.0
  %121 = vmatpush1.msra.mxu0 0.0
  %122 = vmatprep.subr.mxu0 0.0
  %123 = vmatpush1.msra.mxu0 0.0
  %124 = vmatprep.subr.mxu0 0.0
  %125 = vmatpush1.msra.mxu0 0.0
  %126 = vmatprep.subr.mxu0 0.0
  %127 = vmatpush1.msra.mxu0 0.0
  %128 = vmatprep.subr.mxu0 0.0
  %129 = vmatpush1.msra.mxu0 0.0
  %130 = vmatprep.subr.mxu0 0.0
  %131 = vmatpush1.msra.mxu0 0.0
  %132 = vmatprep.subr.mxu0 0.0
  %133 = vmatpush1.msra.mxu0 0.0
  %134 = vmatprep.subr.mxu0 0.0
  %135 = vmatpush1.msra.mxu0 0.0
  %136 = vmatprep.subr.mxu0 0.0
  %137 = vmatpush1.msra.mxu0 0.0
  %138 = vmatprep.subr.mxu0 0.0
  %139 = vmatpush1.msra.mxu0 0.0
  %140 = vmatprep.subr.mxu0 0.0
  %141 = vmatpush1.msra.mxu0 0.0
  %142 = vmatprep.subr.mxu0 0.0
  %143 = vmatpush1.msra.mxu0 0.0
  %144 = vmatprep.subr.mxu0 0.0
  %145 = vmatpush1.msra.mxu0 0.0
  %146 = vmatprep.subr.mxu0 0.0
  %147 = vmatpush1.msra.mxu0 0.0
  %148 = vmatprep.subr.mxu0 0.0
  %149 = vmatpush1.msra.mxu0 0.0
  %150 = vmatprep.subr.mxu0 0.0
  %151 = vmatpush1.msra.mxu0 0.0
  %152 = vmatprep.subr.mxu0 0.0
  %153 = vmatpush1.msra.mxu0 0.0
  %154 = vmatprep.mubr.f32.mxu0 0.0
  %155 = vmatmul.mubr.f32.gmra.mrb[0].mxu0 %v73
  %v156 = vpop.f32.mrb[0].mxu0
  %v157 = vadd.f32 0.0, %v156
  %v158 = vpop.f32.mrb[0].mxu0
  %159 = vmatprep.mubr.f32.mxu0 0.0
  %160 = vmatmul.mubr.f32.gmra.mrb[0].mxu0 %v76
  %v161 = vpop.f32.mrb[0].mxu0
  %v162 = vadd.f32 0.0, %v161
  %v163 = vpop.f32.mrb[0].mxu0
  %164 = vmatprep.mubr.f32.mxu0 0.0
  %165 = vmatmul.mubr.f32.gmra.mrb[0].mxu0 %v79
  %v166 = vpop.f32.mrb[0].mxu0
  %v167 = vadd.f32 0.0, %v166
  %v168 = vpop.f32.mrb[0].mxu0
  %169 = vmatprep.mubr.f32.mxu0 0.0
  %170 = vmatmul.mubr.f32.gmra.mrb[0].mxu0 %v82
  %v171 = vpop.f32.mrb[0].mxu0
  %v172 = vadd.f32 0.0, %v171
  %v173 = vpop.f32.mrb[0].mxu0
  %174 = vmatprep.mubr.f32.mxu0 0.0
  %175 = vmatmul.mubr.f32.gmra.mrb[0].mxu0 %v85
  %v176 = vpop.f32.mrb[0].mxu0
  %v177 = vadd.f32 0.0, %v176
  %v178 = vpop.f32.mrb[0].mxu0
  %179 = vmatprep.mubr.f32.mxu0 0.0
  %180 = vmatmul.mubr.f32.gmra.mrb[0].mxu0 %v88
  %v181 = vpop.f32.mrb[0].mxu0
  %v182 = vadd.f32 0.0, %v181
  %v183 = vpop.f32.mrb[0].mxu0
  %184 = vdwg.mxu0
  %185 = vrot.lane.b32.xlu0 %v167, 1
  %v186 = vpop.permute.xlu0 %185
  %187 = vrot.lane.b32.xlu0 %v172, 1
  %v188 = vpop.permute.xlu0 %187
  %v189 = vmul.f32 %v59, %v186
  %v190 = vmul.f32 %v59, %v188
  %v191 = vadd.f32 %v157, %v189
  %v192 = vadd.f32 %v162, %v190
  %193 = vrot.lane.b32.xlu0 %v177, 127
  %v194 = vpop.permute.xlu0 %193
  %195 = vrot.lane.b32.xlu0 %v182, 127
  %v196 = vpop.permute.xlu0 %195
  %v197 = vmul.f32 %v62, %v194
  %v198 = vmul.f32 %v62, %v196
  %v199 = vadd.f32 %v191, %v197
  %v200 = vadd.f32 %v192, %v198
  %v201 = vmul.f32 %v199, %v199
  %v202 = vmul.f32 %v200, %v200
  %v203 = vld [vmem:[%s4] sm:$0xff]
  %v204 = vld [vmem:[%s4 + $0x8] sm:$0xff]
  %v206 = vsel %vm71, %v203, 0
  %v209 = vsel %vm71, %v204, 0
  %211 = vmatprep.subr.mxu0 %v201
  %212 = vmatpush1.msra.mxu0 %v199
  %213 = vmatprep.subr.mxu0 %v202
  %214 = vmatpush1.msra.mxu0 %v200
  %215 = vmatprep.subr.mxu0 0.0
  %216 = vmatpush1.msra.mxu0 0.0
  %217 = vmatprep.subr.mxu0 0.0
  %218 = vmatpush1.msra.mxu0 0.0
  %219 = vmatprep.subr.mxu0 0.0
  %220 = vmatpush1.msra.mxu0 0.0
  %221 = vmatprep.subr.mxu0 0.0
  %222 = vmatpush1.msra.mxu0 0.0
  %223 = vmatprep.subr.mxu0 0.0
  %224 = vmatpush1.msra.mxu0 0.0
  %225 = vmatprep.subr.mxu0 0.0
  %226 = vmatpush1.msra.mxu0 0.0
  %227 = vmatprep.subr.mxu0 0.0
  %228 = vmatpush1.msra.mxu0 0.0
  %229 = vmatprep.subr.mxu0 0.0
  %230 = vmatpush1.msra.mxu0 0.0
  %231 = vmatprep.subr.mxu0 0.0
  %232 = vmatpush1.msra.mxu0 0.0
  %233 = vmatprep.subr.mxu0 0.0
  %234 = vmatpush1.msra.mxu0 0.0
  %235 = vmatprep.subr.mxu0 0.0
  %236 = vmatpush1.msra.mxu0 0.0
  %237 = vmatprep.subr.mxu0 0.0
  %238 = vmatpush1.msra.mxu0 0.0
  %239 = vmatprep.subr.mxu0 0.0
  %240 = vmatpush1.msra.mxu0 0.0
  %241 = vmatprep.subr.mxu0 0.0
  %242 = vmatpush1.msra.mxu0 0.0
  %243 = vmatprep.subr.mxu0 0.0
  %244 = vmatpush1.msra.mxu0 0.0
  %245 = vmatprep.subr.mxu0 0.0
  %246 = vmatpush1.msra.mxu0 0.0
  %247 = vmatprep.subr.mxu0 0.0
  %248 = vmatpush1.msra.mxu0 0.0
  %249 = vmatprep.subr.mxu0 0.0
  %250 = vmatpush1.msra.mxu0 0.0
  %251 = vmatprep.subr.mxu0 0.0
  %252 = vmatpush1.msra.mxu0 0.0
  %253 = vmatprep.subr.mxu0 0.0
  %254 = vmatpush1.msra.mxu0 0.0
  %255 = vmatprep.subr.mxu0 0.0
  %256 = vmatpush1.msra.mxu0 0.0
  %257 = vmatprep.subr.mxu0 0.0
  %258 = vmatpush1.msra.mxu0 0.0
  %259 = vmatprep.subr.mxu0 0.0
  %260 = vmatpush1.msra.mxu0 0.0
  %261 = vmatprep.subr.mxu0 0.0
  %262 = vmatpush1.msra.mxu0 0.0
  %263 = vmatprep.subr.mxu0 0.0
  %264 = vmatpush1.msra.mxu0 0.0
  %265 = vmatprep.subr.mxu0 0.0
  %266 = vmatpush1.msra.mxu0 0.0
  %267 = vmatprep.subr.mxu0 0.0
  %268 = vmatpush1.msra.mxu0 0.0
  %269 = vmatprep.subr.mxu0 0.0
  %270 = vmatpush1.msra.mxu0 0.0
  %271 = vmatprep.subr.mxu0 0.0
  %272 = vmatpush1.msra.mxu0 0.0
  %273 = vmatprep.subr.mxu0 0.0
  %274 = vmatpush1.msra.mxu0 0.0
  %275 = vmatprep.mubr.f32.mxu0 0.0
  %276 = vmatmul.mubr.f32.gmra.mrb[0].mxu0 %v206
  %v277 = vpop.f32.mrb[0].mxu0
  %v278 = vadd.f32 0.0, %v277
  %v279 = vpop.f32.mrb[0].mxu0
  %v280 = vadd.f32 0.0, %v279
  %281 = vmatprep.mubr.f32.mxu0 0.0
  %282 = vmatmul.mubr.f32.gmra.mrb[0].mxu0 %v209
  %v283 = vpop.f32.mrb[0].mxu0
  %v284 = vadd.f32 0.0, %v283
  %v285 = vpop.f32.mrb[0].mxu0
  %v286 = vadd.f32 0.0, %v285
  %287 = vdwg.mxu0
  %288 = vadd.xlane.f32.xlu0 %v278
  %v289 = vpop.xlane.xlu0 %288
  %290 = vadd.xlane.f32.xlu0 %v284
  %v291 = vpop.xlane.xlu0 %290
  %v292 = vmul.f32 %v289, 0.0009765625
  %v293 = vmul.f32 %v291, 0.0009765625
  %294 = vadd.xlane.f32.xlu0 %v280
  %v295 = vpop.xlane.xlu0 %294
  %296 = vadd.xlane.f32.xlu0 %v286
  %v297 = vpop.xlane.xlu0 %296
  %v298 = vmul.f32 %v295, 0.0009765625
  %v299 = vmul.f32 %v297, 0.0009765625
  %v300 = vmul.f32 %v292, %v292
  %v301 = vmul.f32 %v293, %v293
  %v302 = vsub.f32 %v298, %v300
  %v303 = vsub.f32 %v299, %v301
  %v304 = vsub.f32 %v199, %v292
  %v305 = vsub.f32 %v200, %v293
  %v306 = vadd.f32 %v302, 1e-05
  %v307 = vadd.f32 %v303, 1e-05
  %v308 = vrsqrt.pop %v306
  %v309 = vrsqrt.pop %v307
  %v310 = vmul.f32 %v304, %v308
  %v311 = vmul.f32 %v305, %v309
  %v312 = vld [vmem:[%s2] sm:$0xff]
  %v313 = vld [vmem:[%s2 + $0x8] sm:$0xff]
  %315 = vset.pattern.permute.xlu0 0
  %316 = vperm.xlu0 %315, %v312
  %v317 = vpop.permute.xlu0 %316
  %320 = vset.pattern.permute.xlu0 0
  %321 = vperm.xlu0 %320, %v313
  %v322 = vpop.permute.xlu0 %321
  %v324 = vmul.f32 %v310, %v317
  %v325 = vmul.f32 %v311, %v322
  %v326 = vld [vmem:[%s3] sm:$0xff]
  %v327 = vld [vmem:[%s3 + $0x8] sm:$0xff]
  %329 = vset.pattern.permute.xlu0 0
  %330 = vperm.xlu0 %329, %v326
  %v331 = vpop.permute.xlu0 %330
  %334 = vset.pattern.permute.xlu0 0
  %335 = vperm.xlu0 %334, %v327
  %v336 = vpop.permute.xlu0 %335
  %v338 = vadd.f32 %v324, %v331
  %v339 = vadd.f32 %v325, %v336
  %s340 = scalar_lea.vmem %s1, 48
  %v341 = vld [vmem:[%s340] sm:$0xff]
  %v342 = vld [vmem:[%s340 + $0x8] sm:$0xff]
  %v343 = vld [vmem:[%s340 + $0x10] sm:$0xff]
  %v344 = vld [vmem:[%s340 + $0x18] sm:$0xff]
  %v345 = vld [vmem:[%s340 + $0x20] sm:$0xff]
  %v346 = vld [vmem:[%s340 + $0x28] sm:$0xff]
  %v348 = vsel %vm71, %v341, 0
  %v351 = vsel %vm71, %v342, 0
  %v354 = vsel %vm71, %v343, 0
  %v357 = vsel %vm71, %v344, 0
  %v360 = vsel %vm71, %v345, 0
  %v363 = vsel %vm71, %v346, 0
  %365 = vmatprep.subr.mxu0 0.0
  %366 = vmatpush1.msra.mxu0 %v338
  %367 = vmatprep.subr.mxu0 0.0
  %368 = vmatpush1.msra.mxu0 %v339
  %369 = vmatprep.subr.mxu0 0.0
  %370 = vmatpush1.msra.mxu0 0.0
  %371 = vmatprep.subr.mxu0 0.0
  %372 = vmatpush1.msra.mxu0 0.0
  %373 = vmatprep.subr.mxu0 0.0
  %374 = vmatpush1.msra.mxu0 0.0
  %375 = vmatprep.subr.mxu0 0.0
  %376 = vmatpush1.msra.mxu0 0.0
  %377 = vmatprep.subr.mxu0 0.0
  %378 = vmatpush1.msra.mxu0 0.0
  %379 = vmatprep.subr.mxu0 0.0
  %380 = vmatpush1.msra.mxu0 0.0
  %381 = vmatprep.subr.mxu0 0.0
  %382 = vmatpush1.msra.mxu0 0.0
  %383 = vmatprep.subr.mxu0 0.0
  %384 = vmatpush1.msra.mxu0 0.0
  %385 = vmatprep.subr.mxu0 0.0
  %386 = vmatpush1.msra.mxu0 0.0
  %387 = vmatprep.subr.mxu0 0.0
  %388 = vmatpush1.msra.mxu0 0.0
  %389 = vmatprep.subr.mxu0 0.0
  %390 = vmatpush1.msra.mxu0 0.0
  %391 = vmatprep.subr.mxu0 0.0
  %392 = vmatpush1.msra.mxu0 0.0
  %393 = vmatprep.subr.mxu0 0.0
  %394 = vmatpush1.msra.mxu0 0.0
  %395 = vmatprep.subr.mxu0 0.0
  %396 = vmatpush1.msra.mxu0 0.0
  %397 = vmatprep.subr.mxu0 0.0
  %398 = vmatpush1.msra.mxu0 0.0
  %399 = vmatprep.subr.mxu0 0.0
  %400 = vmatpush1.msra.mxu0 0.0
  %401 = vmatprep.subr.mxu0 0.0
  %402 = vmatpush1.msra.mxu0 0.0
  %403 = vmatprep.subr.mxu0 0.0
  %404 = vmatpush1.msra.mxu0 0.0
  %405 = vmatprep.subr.mxu0 0.0
  %406 = vmatpush1.msra.mxu0 0.0
  %407 = vmatprep.subr.mxu0 0.0
  %408 = vmatpush1.msra.mxu0 0.0
  %409 = vmatprep.subr.mxu0 0.0
  %410 = vmatpush1.msra.mxu0 0.0
  %411 = vmatprep.subr.mxu0 0.0
  %412 = vmatpush1.msra.mxu0 0.0
  %413 = vmatprep.subr.mxu0 0.0
  %414 = vmatpush1.msra.mxu0 0.0
  %415 = vmatprep.subr.mxu0 0.0
  %416 = vmatpush1.msra.mxu0 0.0
  %417 = vmatprep.subr.mxu0 0.0
  %418 = vmatpush1.msra.mxu0 0.0
  %419 = vmatprep.subr.mxu0 0.0
  %420 = vmatpush1.msra.mxu0 0.0
  %421 = vmatprep.subr.mxu0 0.0
  %422 = vmatpush1.msra.mxu0 0.0
  %423 = vmatprep.subr.mxu0 0.0
  %424 = vmatpush1.msra.mxu0 0.0
  %425 = vmatprep.subr.mxu0 0.0
  %426 = vmatpush1.msra.mxu0 0.0
  %427 = vmatprep.subr.mxu0 0.0
  %428 = vmatpush1.msra.mxu0 0.0
  %429 = vmatprep.mubr.f32.mxu0 0.0
  %430 = vmatmul.mubr.f32.gmra.mrb[0].mxu0 %v348
  %v431 = vpop.f32.mrb[0].mxu0
  %v432 = vadd.f32 0.0, %v431
  %v433 = vpop.f32.mrb[0].mxu0
  %434 = vmatprep.mubr.f32.mxu0 0.0
  %435 = vmatmul.mubr.f32.gmra.mrb[0].mxu0 %v351
  %v436 = vpop.f32.mrb[0].mxu0
  %v437 = vadd.f32 0.0, %v436
  %v438 = vpop.f32.mrb[0].mxu0
  %439 = vmatprep.mubr.f32.mxu0 0.0
  %440 = vmatmul.mubr.f32.gmra.mrb[0].mxu0 %v354
  %v441 = vpop.f32.mrb[0].mxu0
  %v442 = vadd.f32 0.0, %v441
  %v443 = vpop.f32.mrb[0].mxu0
  %444 = vmatprep.mubr.f32.mxu0 0.0
  %445 = vmatmul.mubr.f32.gmra.mrb[0].mxu0 %v357
  %v446 = vpop.f32.mrb[0].mxu0
  %v447 = vadd.f32 0.0, %v446
  %v448 = vpop.f32.mrb[0].mxu0
  %449 = vmatprep.mubr.f32.mxu0 0.0
  %450 = vmatmul.mubr.f32.gmra.mrb[0].mxu0 %v360
  %v451 = vpop.f32.mrb[0].mxu0
  %v452 = vadd.f32 0.0, %v451
  %v453 = vpop.f32.mrb[0].mxu0
  %454 = vmatprep.mubr.f32.mxu0 0.0
  %455 = vmatmul.mubr.f32.gmra.mrb[0].mxu0 %v363
  %v456 = vpop.f32.mrb[0].mxu0
  %v457 = vadd.f32 0.0, %v456
  %v458 = vpop.f32.mrb[0].mxu0
  %459 = vdwg.mxu0
  %460 = vrot.lane.b32.xlu0 %v442, 1
  %v461 = vpop.permute.xlu0 %460
  %462 = vrot.lane.b32.xlu0 %v447, 1
  %v463 = vpop.permute.xlu0 %462
  %v464 = vmul.f32 %v59, %v461
  %v465 = vmul.f32 %v59, %v463
  %v466 = vadd.f32 %v432, %v464
  %v467 = vadd.f32 %v437, %v465
  %468 = vrot.lane.b32.xlu0 %v452, 127
  %v469 = vpop.permute.xlu0 %468
  %470 = vrot.lane.b32.xlu0 %v457, 127
  %v471 = vpop.permute.xlu0 %470
  %v472 = vmul.f32 %v62, %v469
  %v473 = vmul.f32 %v62, %v471
  %v474 = vadd.f32 %v466, %v472
  %v475 = vadd.f32 %v467, %v473
  %v476 = vmul.f32 %v474, %v474
  %v477 = vmul.f32 %v475, %v475
  %s478 = scalar_lea.vmem %s4, 16
  %v479 = vld [vmem:[%s478] sm:$0xff]
  %v480 = vld [vmem:[%s478 + $0x8] sm:$0xff]
  %v482 = vsel %vm71, %v479, 0
  %v485 = vsel %vm71, %v480, 0
  %487 = vmatprep.subr.mxu0 %v476
  %488 = vmatpush1.msra.mxu0 %v474
  %489 = vmatprep.subr.mxu0 %v477
  %490 = vmatpush1.msra.mxu0 %v475
  %491 = vmatprep.subr.mxu0 0.0
  %492 = vmatpush1.msra.mxu0 0.0
  %493 = vmatprep.subr.mxu0 0.0
  %494 = vmatpush1.msra.mxu0 0.0
  %495 = vmatprep.subr.mxu0 0.0
  %496 = vmatpush1.msra.mxu0 0.0
  %497 = vmatprep.subr.mxu0 0.0
  %498 = vmatpush1.msra.mxu0 0.0
  %499 = vmatprep.subr.mxu0 0.0
  %500 = vmatpush1.msra.mxu0 0.0
  %501 = vmatprep.subr.mxu0 0.0
  %502 = vmatpush1.msra.mxu0 0.0
  %503 = vmatprep.subr.mxu0 0.0
  %504 = vmatpush1.msra.mxu0 0.0
  %505 = vmatprep.subr.mxu0 0.0
  %506 = vmatpush1.msra.mxu0 0.0
  %507 = vmatprep.subr.mxu0 0.0
  %508 = vmatpush1.msra.mxu0 0.0
  %509 = vmatprep.subr.mxu0 0.0
  %510 = vmatpush1.msra.mxu0 0.0
  %511 = vmatprep.subr.mxu0 0.0
  %512 = vmatpush1.msra.mxu0 0.0
  %513 = vmatprep.subr.mxu0 0.0
  %514 = vmatpush1.msra.mxu0 0.0
  %515 = vmatprep.subr.mxu0 0.0
  %516 = vmatpush1.msra.mxu0 0.0
  %517 = vmatprep.subr.mxu0 0.0
  %518 = vmatpush1.msra.mxu0 0.0
  %519 = vmatprep.subr.mxu0 0.0
  %520 = vmatpush1.msra.mxu0 0.0
  %521 = vmatprep.subr.mxu0 0.0
  %522 = vmatpush1.msra.mxu0 0.0
  %523 = vmatprep.subr.mxu0 0.0
  %524 = vmatpush1.msra.mxu0 0.0
  %525 = vmatprep.subr.mxu0 0.0
  %526 = vmatpush1.msra.mxu0 0.0
  %527 = vmatprep.subr.mxu0 0.0
  %528 = vmatpush1.msra.mxu0 0.0
  %529 = vmatprep.subr.mxu0 0.0
  %530 = vmatpush1.msra.mxu0 0.0
  %531 = vmatprep.subr.mxu0 0.0
  %532 = vmatpush1.msra.mxu0 0.0
  %533 = vmatprep.subr.mxu0 0.0
  %534 = vmatpush1.msra.mxu0 0.0
  %535 = vmatprep.subr.mxu0 0.0
  %536 = vmatpush1.msra.mxu0 0.0
  %537 = vmatprep.subr.mxu0 0.0
  %538 = vmatpush1.msra.mxu0 0.0
  %539 = vmatprep.subr.mxu0 0.0
  %540 = vmatpush1.msra.mxu0 0.0
  %541 = vmatprep.subr.mxu0 0.0
  %542 = vmatpush1.msra.mxu0 0.0
  %543 = vmatprep.subr.mxu0 0.0
  %544 = vmatpush1.msra.mxu0 0.0
  %545 = vmatprep.subr.mxu0 0.0
  %546 = vmatpush1.msra.mxu0 0.0
  %547 = vmatprep.subr.mxu0 0.0
  %548 = vmatpush1.msra.mxu0 0.0
  %549 = vmatprep.subr.mxu0 0.0
  %550 = vmatpush1.msra.mxu0 0.0
  %551 = vmatprep.mubr.f32.mxu0 0.0
  %552 = vmatmul.mubr.f32.gmra.mrb[0].mxu0 %v482
  %v553 = vpop.f32.mrb[0].mxu0
  %v554 = vadd.f32 0.0, %v553
  %v555 = vpop.f32.mrb[0].mxu0
  %v556 = vadd.f32 0.0, %v555
  %557 = vmatprep.mubr.f32.mxu0 0.0
  %558 = vmatmul.mubr.f32.gmra.mrb[0].mxu0 %v485
  %v559 = vpop.f32.mrb[0].mxu0
  %v560 = vadd.f32 0.0, %v559
  %v561 = vpop.f32.mrb[0].mxu0
  %v562 = vadd.f32 0.0, %v561
  %563 = vdwg.mxu0
  %564 = vadd.xlane.f32.xlu0 %v554
  %v565 = vpop.xlane.xlu0 %564
  %566 = vadd.xlane.f32.xlu0 %v560
  %v567 = vpop.xlane.xlu0 %566
  %v568 = vmul.f32 %v565, 0.001953125
  %v569 = vmul.f32 %v567, 0.001953125
  %570 = vadd.xlane.f32.xlu0 %v556
  %v571 = vpop.xlane.xlu0 %570
  %572 = vadd.xlane.f32.xlu0 %v562
  %v573 = vpop.xlane.xlu0 %572
  %v574 = vmul.f32 %v571, 0.001953125
  %v575 = vmul.f32 %v573, 0.001953125
  %v576 = vmul.f32 %v568, %v568
  %v577 = vmul.f32 %v569, %v569
  %v578 = vsub.f32 %v574, %v576
  %v579 = vsub.f32 %v575, %v577
  %v580 = vsub.f32 %v474, %v568
  %v581 = vsub.f32 %v475, %v569
  %v582 = vadd.f32 %v578, 1e-05
  %v583 = vadd.f32 %v579, 1e-05
  %v584 = vrsqrt.pop %v582
  %v585 = vrsqrt.pop %v583
  %v586 = vmul.f32 %v580, %v584
  %v587 = vmul.f32 %v581, %v585
  %s588 = scalar_lea.vmem %s2, 16
  %v589 = vld [vmem:[%s588] sm:$0xff]
  %v590 = vld [vmem:[%s588 + $0x8] sm:$0xff]
  %592 = vset.pattern.permute.xlu0 0
  %593 = vperm.xlu0 %592, %v589
  %v594 = vpop.permute.xlu0 %593
  %597 = vset.pattern.permute.xlu0 0
  %598 = vperm.xlu0 %597, %v590
  %v599 = vpop.permute.xlu0 %598
  %v601 = vmul.f32 %v586, %v594
  %v602 = vmul.f32 %v587, %v599
  %s603 = scalar_lea.vmem %s3, 16
  %v604 = vld [vmem:[%s603] sm:$0xff]
  %v605 = vld [vmem:[%s603 + $0x8] sm:$0xff]
  %607 = vset.pattern.permute.xlu0 0
  %608 = vperm.xlu0 %607, %v604
  %v609 = vpop.permute.xlu0 %608
  %612 = vset.pattern.permute.xlu0 0
  %613 = vperm.xlu0 %612, %v605
  %v614 = vpop.permute.xlu0 %613
  %v616 = vadd.f32 %v601, %v609
  %v617 = vadd.f32 %v602, %v614
  %s618 = scalar_lea.vmem %s1, 96
  %v619 = vld [vmem:[%s618] sm:$0xff]
  %v620 = vld [vmem:[%s618 + $0x8] sm:$0xff]
  %v621 = vld [vmem:[%s618 + $0x10] sm:$0xff]
  %v622 = vld [vmem:[%s618 + $0x18] sm:$0xff]
  %v623 = vld [vmem:[%s618 + $0x20] sm:$0xff]
  %v624 = vld [vmem:[%s618 + $0x28] sm:$0xff]
  %v626 = vsel %vm71, %v619, 0
  %v629 = vsel %vm71, %v620, 0
  %v632 = vsel %vm71, %v621, 0
  %v635 = vsel %vm71, %v622, 0
  %v638 = vsel %vm71, %v623, 0
  %v641 = vsel %vm71, %v624, 0
  %643 = vmatprep.subr.mxu0 0.0
  %644 = vmatpush1.msra.mxu0 %v616
  %645 = vmatprep.subr.mxu0 0.0
  %646 = vmatpush1.msra.mxu0 %v617
  %647 = vmatprep.subr.mxu0 0.0
  %648 = vmatpush1.msra.mxu0 0.0
  %649 = vmatprep.subr.mxu0 0.0
  %650 = vmatpush1.msra.mxu0 0.0
  %651 = vmatprep.subr.mxu0 0.0
  %652 = vmatpush1.msra.mxu0 0.0
  %653 = vmatprep.subr.mxu0 0.0
  %654 = vmatpush1.msra.mxu0 0.0
  %655 = vmatprep.subr.mxu0 0.0
  %656 = vmatpush1.msra.mxu0 0.0
  %657 = vmatprep.subr.mxu0 0.0
  %658 = vmatpush1.msra.mxu0 0.0
  %659 = vmatprep.subr.mxu0 0.0
  %660 = vmatpush1.msra.mxu0 0.0
  %661 = vmatprep.subr.mxu0 0.0
  %662 = vmatpush1.msra.mxu0 0.0
  %663 = vmatprep.subr.mxu0 0.0
  %664 = vmatpush1.msra.mxu0 0.0
  %665 = vmatprep.subr.mxu0 0.0
  %666 = vmatpush1.msra.mxu0 0.0
  %667 = vmatprep.subr.mxu0 0.0
  %668 = vmatpush1.msra.mxu0 0.0
  %669 = vmatprep.subr.mxu0 0.0
  %670 = vmatpush1.msra.mxu0 0.0
  %671 = vmatprep.subr.mxu0 0.0
  %672 = vmatpush1.msra.mxu0 0.0
  %673 = vmatprep.subr.mxu0 0.0
  %674 = vmatpush1.msra.mxu0 0.0
  %675 = vmatprep.subr.mxu0 0.0
  %676 = vmatpush1.msra.mxu0 0.0
  %677 = vmatprep.subr.mxu0 0.0
  %678 = vmatpush1.msra.mxu0 0.0
  %679 = vmatprep.subr.mxu0 0.0
  %680 = vmatpush1.msra.mxu0 0.0
  %681 = vmatprep.subr.mxu0 0.0
  %682 = vmatpush1.msra.mxu0 0.0
  %683 = vmatprep.subr.mxu0 0.0
  %684 = vmatpush1.msra.mxu0 0.0
  %685 = vmatprep.subr.mxu0 0.0
  %686 = vmatpush1.msra.mxu0 0.0
  %687 = vmatprep.subr.mxu0 0.0
  %688 = vmatpush1.msra.mxu0 0.0
  %689 = vmatprep.subr.mxu0 0.0
  %690 = vmatpush1.msra.mxu0 0.0
  %691 = vmatprep.subr.mxu0 0.0
  %692 = vmatpush1.msra.mxu0 0.0
  %693 = vmatprep.subr.mxu0 0.0
  %694 = vmatpush1.msra.mxu0 0.0
  %695 = vmatprep.subr.mxu0 0.0
  %696 = vmatpush1.msra.mxu0 0.0
  %697 = vmatprep.subr.mxu0 0.0
  %698 = vmatpush1.msra.mxu0 0.0
  %699 = vmatprep.subr.mxu0 0.0
  %700 = vmatpush1.msra.mxu0 0.0
  %701 = vmatprep.subr.mxu0 0.0
  %702 = vmatpush1.msra.mxu0 0.0
  %703 = vmatprep.subr.mxu0 0.0
  %704 = vmatpush1.msra.mxu0 0.0
  %705 = vmatprep.subr.mxu0 0.0
  %706 = vmatpush1.msra.mxu0 0.0
  %707 = vmatprep.mubr.f32.mxu0 0.0
  %708 = vmatmul.mubr.f32.gmra.mrb[0].mxu0 %v626
  %v709 = vpop.f32.mrb[0].mxu0
  %v710 = vadd.f32 0.0, %v709
  %v711 = vpop.f32.mrb[0].mxu0
  %712 = vmatprep.mubr.f32.mxu0 0.0
  %713 = vmatmul.mubr.f32.gmra.mrb[0].mxu0 %v629
  %v714 = vpop.f32.mrb[0].mxu0
  %v715 = vadd.f32 0.0, %v714
  %v716 = vpop.f32.mrb[0].mxu0
  %717 = vmatprep.mubr.f32.mxu0 0.0
  %718 = vmatmul.mubr.f32.gmra.mrb[0].mxu0 %v632
  %v719 = vpop.f32.mrb[0].mxu0
  %v720 = vadd.f32 0.0, %v719
  %v721 = vpop.f32.mrb[0].mxu0
  %722 = vmatprep.mubr.f32.mxu0 0.0
  %723 = vmatmul.mubr.f32.gmra.mrb[0].mxu0 %v635
  %v724 = vpop.f32.mrb[0].mxu0
  %v725 = vadd.f32 0.0, %v724
  %v726 = vpop.f32.mrb[0].mxu0
  %727 = vmatprep.mubr.f32.mxu0 0.0
  %728 = vmatmul.mubr.f32.gmra.mrb[0].mxu0 %v638
  %v729 = vpop.f32.mrb[0].mxu0
  %v730 = vadd.f32 0.0, %v729
  %v731 = vpop.f32.mrb[0].mxu0
  %732 = vmatprep.mubr.f32.mxu0 0.0
  %733 = vmatmul.mubr.f32.gmra.mrb[0].mxu0 %v641
  %v734 = vpop.f32.mrb[0].mxu0
  %v735 = vadd.f32 0.0, %v734
  %v736 = vpop.f32.mrb[0].mxu0
  %737 = vdwg.mxu0
  %738 = vrot.lane.b32.xlu0 %v720, 1
  %v739 = vpop.permute.xlu0 %738
  %740 = vrot.lane.b32.xlu0 %v725, 1
  %v741 = vpop.permute.xlu0 %740
  %v742 = vmul.f32 %v59, %v739
  %v743 = vmul.f32 %v59, %v741
  %v744 = vadd.f32 %v710, %v742
  %v745 = vadd.f32 %v715, %v743
  %746 = vrot.lane.b32.xlu0 %v730, 127
  %v747 = vpop.permute.xlu0 %746
  %748 = vrot.lane.b32.xlu0 %v735, 127
  %v749 = vpop.permute.xlu0 %748
  %v750 = vmul.f32 %v62, %v747
  %v751 = vmul.f32 %v62, %v749
  %v752 = vadd.f32 %v744, %v750
  %v753 = vadd.f32 %v745, %v751
  %v754 = vmul.f32 %v752, %v752
  %v755 = vmul.f32 %v753, %v753
  %s756 = scalar_lea.vmem %s4, 32
  %v757 = vld [vmem:[%s756] sm:$0xff]
  %v758 = vld [vmem:[%s756 + $0x8] sm:$0xff]
  %v760 = vsel %vm71, %v757, 0
  %v763 = vsel %vm71, %v758, 0
  %765 = vmatprep.subr.mxu0 %v754
  %766 = vmatpush1.msra.mxu0 %v752
  %767 = vmatprep.subr.mxu0 %v755
  %768 = vmatpush1.msra.mxu0 %v753
  %769 = vmatprep.subr.mxu0 0.0
  %770 = vmatpush1.msra.mxu0 0.0
  %771 = vmatprep.subr.mxu0 0.0
  %772 = vmatpush1.msra.mxu0 0.0
  %773 = vmatprep.subr.mxu0 0.0
  %774 = vmatpush1.msra.mxu0 0.0
  %775 = vmatprep.subr.mxu0 0.0
  %776 = vmatpush1.msra.mxu0 0.0
  %777 = vmatprep.subr.mxu0 0.0
  %778 = vmatpush1.msra.mxu0 0.0
  %779 = vmatprep.subr.mxu0 0.0
  %780 = vmatpush1.msra.mxu0 0.0
  %781 = vmatprep.subr.mxu0 0.0
  %782 = vmatpush1.msra.mxu0 0.0
  %783 = vmatprep.subr.mxu0 0.0
  %784 = vmatpush1.msra.mxu0 0.0
  %785 = vmatprep.subr.mxu0 0.0
  %786 = vmatpush1.msra.mxu0 0.0
  %787 = vmatprep.subr.mxu0 0.0
  %788 = vmatpush1.msra.mxu0 0.0
  %789 = vmatprep.subr.mxu0 0.0
  %790 = vmatpush1.msra.mxu0 0.0
  %791 = vmatprep.subr.mxu0 0.0
  %792 = vmatpush1.msra.mxu0 0.0
  %793 = vmatprep.subr.mxu0 0.0
  %794 = vmatpush1.msra.mxu0 0.0
  %795 = vmatprep.subr.mxu0 0.0
  %796 = vmatpush1.msra.mxu0 0.0
  %797 = vmatprep.subr.mxu0 0.0
  %798 = vmatpush1.msra.mxu0 0.0
  %799 = vmatprep.subr.mxu0 0.0
  %800 = vmatpush1.msra.mxu0 0.0
  %801 = vmatprep.subr.mxu0 0.0
  %802 = vmatpush1.msra.mxu0 0.0
  %803 = vmatprep.subr.mxu0 0.0
  %804 = vmatpush1.msra.mxu0 0.0
  %805 = vmatprep.subr.mxu0 0.0
  %806 = vmatpush1.msra.mxu0 0.0
  %807 = vmatprep.subr.mxu0 0.0
  %808 = vmatpush1.msra.mxu0 0.0
  %809 = vmatprep.subr.mxu0 0.0
  %810 = vmatpush1.msra.mxu0 0.0
  %811 = vmatprep.subr.mxu0 0.0
  %812 = vmatpush1.msra.mxu0 0.0
  %813 = vmatprep.subr.mxu0 0.0
  %814 = vmatpush1.msra.mxu0 0.0
  %815 = vmatprep.subr.mxu0 0.0
  %816 = vmatpush1.msra.mxu0 0.0
  %817 = vmatprep.subr.mxu0 0.0
  %818 = vmatpush1.msra.mxu0 0.0
  %819 = vmatprep.subr.mxu0 0.0
  %820 = vmatpush1.msra.mxu0 0.0
  %821 = vmatprep.subr.mxu0 0.0
  %822 = vmatpush1.msra.mxu0 0.0
  %823 = vmatprep.subr.mxu0 0.0
  %824 = vmatpush1.msra.mxu0 0.0
  %825 = vmatprep.subr.mxu0 0.0
  %826 = vmatpush1.msra.mxu0 0.0
  %827 = vmatprep.subr.mxu0 0.0
  %828 = vmatpush1.msra.mxu0 0.0
  %829 = vmatprep.mubr.f32.mxu0 0.0
  %830 = vmatmul.mubr.f32.gmra.mrb[0].mxu0 %v760
  %v831 = vpop.f32.mrb[0].mxu0
  %v832 = vadd.f32 0.0, %v831
  %v833 = vpop.f32.mrb[0].mxu0
  %v834 = vadd.f32 0.0, %v833
  %835 = vmatprep.mubr.f32.mxu0 0.0
  %836 = vmatmul.mubr.f32.gmra.mrb[0].mxu0 %v763
  %v837 = vpop.f32.mrb[0].mxu0
  %v838 = vadd.f32 0.0, %v837
  %v839 = vpop.f32.mrb[0].mxu0
  %v840 = vadd.f32 0.0, %v839
  %841 = vdwg.mxu0
  %842 = vadd.xlane.f32.xlu0 %v832
  %v843 = vpop.xlane.xlu0 %842
  %844 = vadd.xlane.f32.xlu0 %v838
  %v845 = vpop.xlane.xlu0 %844
  %v846 = vmul.f32 %v843, 0.00390625
  %v847 = vmul.f32 %v845, 0.00390625
  %848 = vadd.xlane.f32.xlu0 %v834
  %v849 = vpop.xlane.xlu0 %848
  %850 = vadd.xlane.f32.xlu0 %v840
  %v851 = vpop.xlane.xlu0 %850
  %v852 = vmul.f32 %v849, 0.00390625
  %v853 = vmul.f32 %v851, 0.00390625
  %v854 = vmul.f32 %v846, %v846
  %v855 = vmul.f32 %v847, %v847
  %v856 = vsub.f32 %v852, %v854
  %v857 = vsub.f32 %v853, %v855
  %v858 = vsub.f32 %v752, %v846
  %v859 = vsub.f32 %v753, %v847
  %v860 = vadd.f32 %v856, 1e-05
  %v861 = vadd.f32 %v857, 1e-05
  %v862 = vrsqrt.pop %v860
  %v863 = vrsqrt.pop %v861
  %v864 = vmul.f32 %v858, %v862
  %v865 = vmul.f32 %v859, %v863
  %s866 = scalar_lea.vmem %s2, 32
  %v867 = vld [vmem:[%s866] sm:$0xff]
  %v868 = vld [vmem:[%s866 + $0x8] sm:$0xff]
  %870 = vset.pattern.permute.xlu0 0
  %871 = vperm.xlu0 %870, %v867
  %v872 = vpop.permute.xlu0 %871
  %875 = vset.pattern.permute.xlu0 0
  %876 = vperm.xlu0 %875, %v868
  %v877 = vpop.permute.xlu0 %876
  %v879 = vmul.f32 %v864, %v872
  %v880 = vmul.f32 %v865, %v877
  %s881 = scalar_lea.vmem %s3, 32
  %v882 = vld [vmem:[%s881] sm:$0xff]
  %v883 = vld [vmem:[%s881 + $0x8] sm:$0xff]
  %885 = vset.pattern.permute.xlu0 0
  %886 = vperm.xlu0 %885, %v882
  %v887 = vpop.permute.xlu0 %886
  %890 = vset.pattern.permute.xlu0 0
  %891 = vperm.xlu0 %890, %v883
  %v892 = vpop.permute.xlu0 %891
  %v894 = vadd.f32 %v879, %v887
  %v895 = vadd.f32 %v880, %v892
  %s896 = scalar_lea.vmem %s1, 144
  %v897 = vld [vmem:[%s896] sm:$0xff]
  %v898 = vld [vmem:[%s896 + $0x8] sm:$0xff]
  %v899 = vld [vmem:[%s896 + $0x10] sm:$0xff]
  %v900 = vld [vmem:[%s896 + $0x18] sm:$0xff]
  %v901 = vld [vmem:[%s896 + $0x20] sm:$0xff]
  %v902 = vld [vmem:[%s896 + $0x28] sm:$0xff]
  %v904 = vsel %vm71, %v897, 0
  %v907 = vsel %vm71, %v898, 0
  %v910 = vsel %vm71, %v899, 0
  %v913 = vsel %vm71, %v900, 0
  %v916 = vsel %vm71, %v901, 0
  %v919 = vsel %vm71, %v902, 0
  %921 = vmatprep.subr.mxu0 0.0
  %922 = vmatpush1.msra.mxu0 %v894
  %923 = vmatprep.subr.mxu0 0.0
  %924 = vmatpush1.msra.mxu0 %v895
  %925 = vmatprep.subr.mxu0 0.0
  %926 = vmatpush1.msra.mxu0 0.0
  %927 = vmatprep.subr.mxu0 0.0
  %928 = vmatpush1.msra.mxu0 0.0
  %929 = vmatprep.subr.mxu0 0.0
  %930 = vmatpush1.msra.mxu0 0.0
  %931 = vmatprep.subr.mxu0 0.0
  %932 = vmatpush1.msra.mxu0 0.0
  %933 = vmatprep.subr.mxu0 0.0
  %934 = vmatpush1.msra.mxu0 0.0
  %935 = vmatprep.subr.mxu0 0.0
  %936 = vmatpush1.msra.mxu0 0.0
  %937 = vmatprep.subr.mxu0 0.0
  %938 = vmatpush1.msra.mxu0 0.0
  %939 = vmatprep.subr.mxu0 0.0
  %940 = vmatpush1.msra.mxu0 0.0
  %941 = vmatprep.subr.mxu0 0.0
  %942 = vmatpush1.msra.mxu0 0.0
  %943 = vmatprep.subr.mxu0 0.0
  %944 = vmatpush1.msra.mxu0 0.0
  %945 = vmatprep.subr.mxu0 0.0
  %946 = vmatpush1.msra.mxu0 0.0
  %947 = vmatprep.subr.mxu0 0.0
  %948 = vmatpush1.msra.mxu0 0.0
  %949 = vmatprep.subr.mxu0 0.0
  %950 = vmatpush1.msra.mxu0 0.0
  %951 = vmatprep.subr.mxu0 0.0
  %952 = vmatpush1.msra.mxu0 0.0
  %953 = vmatprep.subr.mxu0 0.0
  %954 = vmatpush1.msra.mxu0 0.0
  %955 = vmatprep.subr.mxu0 0.0
  %956 = vmatpush1.msra.mxu0 0.0
  %957 = vmatprep.subr.mxu0 0.0
  %958 = vmatpush1.msra.mxu0 0.0
  %959 = vmatprep.subr.mxu0 0.0
  %960 = vmatpush1.msra.mxu0 0.0
  %961 = vmatprep.subr.mxu0 0.0
  %962 = vmatpush1.msra.mxu0 0.0
  %963 = vmatprep.subr.mxu0 0.0
  %964 = vmatpush1.msra.mxu0 0.0
  %965 = vmatprep.subr.mxu0 0.0
  %966 = vmatpush1.msra.mxu0 0.0
  %967 = vmatprep.subr.mxu0 0.0
  %968 = vmatpush1.msra.mxu0 0.0
  %969 = vmatprep.subr.mxu0 0.0
  %970 = vmatpush1.msra.mxu0 0.0
  %971 = vmatprep.subr.mxu0 0.0
  %972 = vmatpush1.msra.mxu0 0.0
  %973 = vmatprep.subr.mxu0 0.0
  %974 = vmatpush1.msra.mxu0 0.0
  %975 = vmatprep.subr.mxu0 0.0
  %976 = vmatpush1.msra.mxu0 0.0
  %977 = vmatprep.subr.mxu0 0.0
  %978 = vmatpush1.msra.mxu0 0.0
  %979 = vmatprep.subr.mxu0 0.0
  %980 = vmatpush1.msra.mxu0 0.0
  %981 = vmatprep.subr.mxu0 0.0
  %982 = vmatpush1.msra.mxu0 0.0
  %983 = vmatprep.subr.mxu0 0.0
  %984 = vmatpush1.msra.mxu0 0.0
  %985 = vmatprep.mubr.f32.mxu0 0.0
  %986 = vmatmul.mubr.f32.gmra.mrb[0].mxu0 %v904
  %v987 = vpop.f32.mrb[0].mxu0
  %v988 = vadd.f32 0.0, %v987
  %v989 = vpop.f32.mrb[0].mxu0
  %990 = vmatprep.mubr.f32.mxu0 0.0
  %991 = vmatmul.mubr.f32.gmra.mrb[0].mxu0 %v907
  %v992 = vpop.f32.mrb[0].mxu0
  %v993 = vadd.f32 0.0, %v992
  %v994 = vpop.f32.mrb[0].mxu0
  %995 = vmatprep.mubr.f32.mxu0 0.0
  %996 = vmatmul.mubr.f32.gmra.mrb[0].mxu0 %v910
  %v997 = vpop.f32.mrb[0].mxu0
  %v998 = vadd.f32 0.0, %v997
  %v999 = vpop.f32.mrb[0].mxu0
  %1000 = vmatprep.mubr.f32.mxu0 0.0
  %1001 = vmatmul.mubr.f32.gmra.mrb[0].mxu0 %v913
  %v1002 = vpop.f32.mrb[0].mxu0
  %v1003 = vadd.f32 0.0, %v1002
  %v1004 = vpop.f32.mrb[0].mxu0
  %1005 = vmatprep.mubr.f32.mxu0 0.0
  %1006 = vmatmul.mubr.f32.gmra.mrb[0].mxu0 %v916
  %v1007 = vpop.f32.mrb[0].mxu0
  %v1008 = vadd.f32 0.0, %v1007
  %v1009 = vpop.f32.mrb[0].mxu0
  %1010 = vmatprep.mubr.f32.mxu0 0.0
  %1011 = vmatmul.mubr.f32.gmra.mrb[0].mxu0 %v919
  %v1012 = vpop.f32.mrb[0].mxu0
  %v1013 = vadd.f32 0.0, %v1012
  %v1014 = vpop.f32.mrb[0].mxu0
  %1015 = vdwg.mxu0
  %1016 = vrot.lane.b32.xlu0 %v998, 1
  %v1017 = vpop.permute.xlu0 %1016
  %1018 = vrot.lane.b32.xlu0 %v1003, 1
  %v1019 = vpop.permute.xlu0 %1018
  %v1020 = vmul.f32 %v59, %v1017
  %v1021 = vmul.f32 %v59, %v1019
  %v1022 = vadd.f32 %v988, %v1020
  %v1023 = vadd.f32 %v993, %v1021
  %1024 = vrot.lane.b32.xlu0 %v1008, 127
  %v1025 = vpop.permute.xlu0 %1024
  %1026 = vrot.lane.b32.xlu0 %v1013, 127
  %v1027 = vpop.permute.xlu0 %1026
  %v1028 = vmul.f32 %v62, %v1025
  %v1029 = vmul.f32 %v62, %v1027
  %v1030 = vadd.f32 %v1022, %v1028
  %v1031 = vadd.f32 %v1023, %v1029
  %v1032 = vmul.f32 %v1030, %v1030
  %v1033 = vmul.f32 %v1031, %v1031
  %s1034 = scalar_lea.vmem %s4, 48
  %v1035 = vld [vmem:[%s1034] sm:$0xff]
  %v1036 = vld [vmem:[%s1034 + $0x8] sm:$0xff]
  %v1038 = vsel %vm71, %v1035, 0
  %v1041 = vsel %vm71, %v1036, 0
  %1043 = vmatprep.subr.mxu0 %v1032
  %1044 = vmatpush1.msra.mxu0 %v1030
  %1045 = vmatprep.subr.mxu0 %v1033
  %1046 = vmatpush1.msra.mxu0 %v1031
  %1047 = vmatprep.subr.mxu0 0.0
  %1048 = vmatpush1.msra.mxu0 0.0
  %1049 = vmatprep.subr.mxu0 0.0
  %1050 = vmatpush1.msra.mxu0 0.0
  %1051 = vmatprep.subr.mxu0 0.0
  %1052 = vmatpush1.msra.mxu0 0.0
  %1053 = vmatprep.subr.mxu0 0.0
  %1054 = vmatpush1.msra.mxu0 0.0
  %1055 = vmatprep.subr.mxu0 0.0
  %1056 = vmatpush1.msra.mxu0 0.0
  %1057 = vmatprep.subr.mxu0 0.0
  %1058 = vmatpush1.msra.mxu0 0.0
  %1059 = vmatprep.subr.mxu0 0.0
  %1060 = vmatpush1.msra.mxu0 0.0
  %1061 = vmatprep.subr.mxu0 0.0
  %1062 = vmatpush1.msra.mxu0 0.0
  %1063 = vmatprep.subr.mxu0 0.0
  %1064 = vmatpush1.msra.mxu0 0.0
  %1065 = vmatprep.subr.mxu0 0.0
  %1066 = vmatpush1.msra.mxu0 0.0
  %1067 = vmatprep.subr.mxu0 0.0
  %1068 = vmatpush1.msra.mxu0 0.0
  %1069 = vmatprep.subr.mxu0 0.0
  %1070 = vmatpush1.msra.mxu0 0.0
  %1071 = vmatprep.subr.mxu0 0.0
  %1072 = vmatpush1.msra.mxu0 0.0
  %1073 = vmatprep.subr.mxu0 0.0
  %1074 = vmatpush1.msra.mxu0 0.0
  %1075 = vmatprep.subr.mxu0 0.0
  %1076 = vmatpush1.msra.mxu0 0.0
  %1077 = vmatprep.subr.mxu0 0.0
  %1078 = vmatpush1.msra.mxu0 0.0
  %1079 = vmatprep.subr.mxu0 0.0
  %1080 = vmatpush1.msra.mxu0 0.0
  %1081 = vmatprep.subr.mxu0 0.0
  %1082 = vmatpush1.msra.mxu0 0.0
  %1083 = vmatprep.subr.mxu0 0.0
  %1084 = vmatpush1.msra.mxu0 0.0
  %1085 = vmatprep.subr.mxu0 0.0
  %1086 = vmatpush1.msra.mxu0 0.0
  %1087 = vmatprep.subr.mxu0 0.0
  %1088 = vmatpush1.msra.mxu0 0.0
  %1089 = vmatprep.subr.mxu0 0.0
  %1090 = vmatpush1.msra.mxu0 0.0
  %1091 = vmatprep.subr.mxu0 0.0
  %1092 = vmatpush1.msra.mxu0 0.0
  %1093 = vmatprep.subr.mxu0 0.0
  %1094 = vmatpush1.msra.mxu0 0.0
  %1095 = vmatprep.subr.mxu0 0.0
  %1096 = vmatpush1.msra.mxu0 0.0
  %1097 = vmatprep.subr.mxu0 0.0
  %1098 = vmatpush1.msra.mxu0 0.0
  %1099 = vmatprep.subr.mxu0 0.0
  %1100 = vmatpush1.msra.mxu0 0.0
  %1101 = vmatprep.subr.mxu0 0.0
  %1102 = vmatpush1.msra.mxu0 0.0
  %1103 = vmatprep.subr.mxu0 0.0
  %1104 = vmatpush1.msra.mxu0 0.0
  %1105 = vmatprep.subr.mxu0 0.0
  %1106 = vmatpush1.msra.mxu0 0.0
  %1107 = vmatprep.mubr.f32.mxu0 0.0
  %1108 = vmatmul.mubr.f32.gmra.mrb[0].mxu0 %v1038
  %v1109 = vpop.f32.mrb[0].mxu0
  %v1110 = vadd.f32 0.0, %v1109
  %v1111 = vpop.f32.mrb[0].mxu0
  %v1112 = vadd.f32 0.0, %v1111
  %1113 = vmatprep.mubr.f32.mxu0 0.0
  %1114 = vmatmul.mubr.f32.gmra.mrb[0].mxu0 %v1041
  %v1115 = vpop.f32.mrb[0].mxu0
  %v1116 = vadd.f32 0.0, %v1115
  %v1117 = vpop.f32.mrb[0].mxu0
  %v1118 = vadd.f32 0.0, %v1117
  %1119 = vdwg.mxu0
  %1120 = vadd.xlane.f32.xlu0 %v1110
  %v1121 = vpop.xlane.xlu0 %1120
  %1122 = vadd.xlane.f32.xlu0 %v1116
  %v1123 = vpop.xlane.xlu0 %1122
  %v1124 = vmul.f32 %v1121, 0.0078125
  %v1125 = vmul.f32 %v1123, 0.0078125
  %1126 = vadd.xlane.f32.xlu0 %v1112
  %v1127 = vpop.xlane.xlu0 %1126
  %1128 = vadd.xlane.f32.xlu0 %v1118
  %v1129 = vpop.xlane.xlu0 %1128
  %v1130 = vmul.f32 %v1127, 0.0078125
  %v1131 = vmul.f32 %v1129, 0.0078125
  %v1132 = vmul.f32 %v1124, %v1124
  %v1133 = vmul.f32 %v1125, %v1125
  %v1134 = vsub.f32 %v1130, %v1132
  %v1135 = vsub.f32 %v1131, %v1133
  %v1136 = vsub.f32 %v1030, %v1124
  %v1137 = vsub.f32 %v1031, %v1125
  %v1138 = vadd.f32 %v1134, 1e-05
  %v1139 = vadd.f32 %v1135, 1e-05
  %v1140 = vrsqrt.pop %v1138
  %v1141 = vrsqrt.pop %v1139
  %v1142 = vmul.f32 %v1136, %v1140
  %v1143 = vmul.f32 %v1137, %v1141
  %s1144 = scalar_lea.vmem %s2, 48
  %v1145 = vld [vmem:[%s1144] sm:$0xff]
  %v1146 = vld [vmem:[%s1144 + $0x8] sm:$0xff]
  %1148 = vset.pattern.permute.xlu0 0
  %1149 = vperm.xlu0 %1148, %v1145
  %v1150 = vpop.permute.xlu0 %1149
  %1153 = vset.pattern.permute.xlu0 0
  %1154 = vperm.xlu0 %1153, %v1146
  %v1155 = vpop.permute.xlu0 %1154
  %v1157 = vmul.f32 %v1142, %v1150
  %v1158 = vmul.f32 %v1143, %v1155
  %s1159 = scalar_lea.vmem %s3, 48
  %v1160 = vld [vmem:[%s1159] sm:$0xff]
  %v1161 = vld [vmem:[%s1159 + $0x8] sm:$0xff]
  %1163 = vset.pattern.permute.xlu0 0
  %1164 = vperm.xlu0 %1163, %v1160
  %v1165 = vpop.permute.xlu0 %1164
  %1168 = vset.pattern.permute.xlu0 0
  %1169 = vperm.xlu0 %1168, %v1161
  %v1170 = vpop.permute.xlu0 %1169
  %v1172 = vadd.f32 %v1157, %v1165
  %v1173 = vadd.f32 %v1158, %v1170
  %v1174 = vld [vmem:[%s5] sm:$0xff]
  %v1175 = vld [vmem:[%s5 + $0x8] sm:$0xff]
  %v1176 = vld [vmem:[%s5 + $0x10] sm:$0xff]
  %v1177 = vld [vmem:[%s5 + $0x18] sm:$0xff]
  %v1178 = vld [vmem:[%s5 + $0x20] sm:$0xff]
  %v1179 = vld [vmem:[%s5 + $0x28] sm:$0xff]
  %v1180 = vld [vmem:[%s5 + $0x30] sm:$0xff]
  %v1181 = vld [vmem:[%s5 + $0x38] sm:$0xff]
  %v1182 = vld [vmem:[%s5 + $0x40] sm:$0xff]
  %v1183 = vld [vmem:[%s5 + $0x48] sm:$0xff]
  %v1184 = vld [vmem:[%s5 + $0x50] sm:$0xff]
  %v1185 = vld [vmem:[%s5 + $0x58] sm:$0xff]
  %v1186 = vld [vmem:[%s5 + $0x60] sm:$0xff]
  %v1187 = vld [vmem:[%s5 + $0x68] sm:$0xff]
  %v1188 = vld [vmem:[%s5 + $0x70] sm:$0xff]
  %v1189 = vld [vmem:[%s5 + $0x78] sm:$0xff]
  %v1190 = vld [vmem:[%s5 + $0x80] sm:$0xff]
  %v1191 = vld [vmem:[%s5 + $0x88] sm:$0xff]
  %v1192 = vld [vmem:[%s5 + $0x90] sm:$0xff]
  %v1193 = vld [vmem:[%s5 + $0x98] sm:$0xff]
  %v1194 = vld [vmem:[%s5 + $0xa0] sm:$0xff]
  %v1195 = vld [vmem:[%s5 + $0xa8] sm:$0xff]
  %v1196 = vld [vmem:[%s5 + $0xb0] sm:$0xff]
  %v1197 = vld [vmem:[%s5 + $0xb8] sm:$0xff]
  %v1198 = vld [vmem:[%s5 + $0xc0] sm:$0xff]
  %v1199 = vld [vmem:[%s5 + $0xc8] sm:$0xff]
  %v1200 = vld [vmem:[%s5 + $0xd0] sm:$0xff]
  %v1201 = vld [vmem:[%s5 + $0xd8] sm:$0xff]
  %v1202 = vld [vmem:[%s5 + $0xe0] sm:$0xff]
  %v1203 = vld [vmem:[%s5 + $0xe8] sm:$0xff]
  %v1204 = vld [vmem:[%s5 + $0xf0] sm:$0xff]
  %v1205 = vld [vmem:[%s5 + $0xf8] sm:$0xff]
  %vm1206 = vcmask 523264
  %v1208 = vsel %vm1206, %v1172, 0
  %v1211 = vsel %vm1206, %v1173, 0
  %1213 = vmatprep.subr.mxu0 %v1175
  %1214 = vmatpush1.msra.mxu0 %v1174
  %1215 = vmatprep.subr.mxu0 %v1179
  %1216 = vmatpush1.msra.mxu0 %v1178
  %1217 = vmatprep.subr.mxu0 %v1183
  %1218 = vmatpush1.msra.mxu0 %v1182
  %1219 = vmatprep.subr.mxu0 %v1187
  %1220 = vmatpush1.msra.mxu0 %v1186
  %1221 = vmatprep.subr.mxu0 %v1191
  %1222 = vmatpush1.msra.mxu0 %v1190
  %1223 = vmatprep.subr.mxu0 %v1195
  %1224 = vmatpush1.msra.mxu0 %v1194
  %1225 = vmatprep.subr.mxu0 %v1199
  %1226 = vmatpush1.msra.mxu0 %v1198
  %1227 = vmatprep.subr.mxu0 %v1203
  %1228 = vmatpush1.msra.mxu0 %v1202
  %1229 = vmatprep.subr.mxu0 0.0
  %1230 = vmatpush1.msra.mxu0 0.0
  %1231 = vmatprep.subr.mxu0 0.0
  %1232 = vmatpush1.msra.mxu0 0.0
  %1233 = vmatprep.subr.mxu0 0.0
  %1234 = vmatpush1.msra.mxu0 0.0
  %1235 = vmatprep.subr.mxu0 0.0
  %1236 = vmatpush1.msra.mxu0 0.0
  %1237 = vmatprep.subr.mxu0 0.0
  %1238 = vmatpush1.msra.mxu0 0.0
  %1239 = vmatprep.subr.mxu0 0.0
  %1240 = vmatpush1.msra.mxu0 0.0
  %1241 = vmatprep.subr.mxu0 0.0
  %1242 = vmatpush1.msra.mxu0 0.0
  %1243 = vmatprep.subr.mxu0 0.0
  %1244 = vmatpush1.msra.mxu0 0.0
  %1245 = vmatprep.subr.mxu0 0.0
  %1246 = vmatpush1.msra.mxu0 0.0
  %1247 = vmatprep.subr.mxu0 0.0
  %1248 = vmatpush1.msra.mxu0 0.0
  %1249 = vmatprep.subr.mxu0 0.0
  %1250 = vmatpush1.msra.mxu0 0.0
  %1251 = vmatprep.subr.mxu0 0.0
  %1252 = vmatpush1.msra.mxu0 0.0
  %1253 = vmatprep.subr.mxu0 0.0
  %1254 = vmatpush1.msra.mxu0 0.0
  %1255 = vmatprep.subr.mxu0 0.0
  %1256 = vmatpush1.msra.mxu0 0.0
  %1257 = vmatprep.subr.mxu0 0.0
  %1258 = vmatpush1.msra.mxu0 0.0
  %1259 = vmatprep.subr.mxu0 0.0
  %1260 = vmatpush1.msra.mxu0 0.0
  %1261 = vmatprep.subr.mxu0 0.0
  %1262 = vmatpush1.msra.mxu0 0.0
  %1263 = vmatprep.subr.mxu0 0.0
  %1264 = vmatpush1.msra.mxu0 0.0
  %1265 = vmatprep.subr.mxu0 0.0
  %1266 = vmatpush1.msra.mxu0 0.0
  %1267 = vmatprep.subr.mxu0 0.0
  %1268 = vmatpush1.msra.mxu0 0.0
  %1269 = vmatprep.subr.mxu0 0.0
  %1270 = vmatpush1.msra.mxu0 0.0
  %1271 = vmatprep.subr.mxu0 0.0
  %1272 = vmatpush1.msra.mxu0 0.0
  %1273 = vmatprep.subr.mxu0 0.0
  %1274 = vmatpush1.msra.mxu0 0.0
  %1275 = vmatprep.subr.mxu0 0.0
  %1276 = vmatpush1.msra.mxu0 0.0
  %1277 = vmatprep.mubr.f32.mxu0 0.0
  %1278 = vmatmul.mubr.f32.gmra.mrb[0].mxu0 %v1208
  %v1279 = vpop.f32.mrb[0].mxu0
  %v1280 = vadd.f32 0.0, %v1279
  %v1281 = vpop.f32.mrb[0].mxu0
  %v1282 = vadd.f32 0.0, %v1281
  %1283 = vmatprep.mubr.f32.mxu0 0.0
  %1284 = vmatmul.mubr.f32.gmra.mrb[0].mxu0 %v1211
  %v1285 = vpop.f32.mrb[0].mxu0
  %v1286 = vadd.f32 0.0, %v1285
  %v1287 = vpop.f32.mrb[0].mxu0
  %v1288 = vadd.f32 0.0, %v1287
  %1289 = vdwg.mxu0
  %1290 = vmatprep.subr.mxu0 %v1177
  %1291 = vmatpush1.msra.mxu0 %v1176
  %1292 = vmatprep.subr.mxu0 %v1181
  %1293 = vmatpush1.msra.mxu0 %v1180
  %1294 = vmatprep.subr.mxu0 %v1185
  %1295 = vmatpush1.msra.mxu0 %v1184
  %1296 = vmatprep.subr.mxu0 %v1189
  %1297 = vmatpush1.msra.mxu0 %v1188
  %1298 = vmatprep.subr.mxu0 %v1193
  %1299 = vmatpush1.msra.mxu0 %v1192
  %1300 = vmatprep.subr.mxu0 %v1197
  %1301 = vmatpush1.msra.mxu0 %v1196
  %1302 = vmatprep.subr.mxu0 %v1201
  %1303 = vmatpush1.msra.mxu0 %v1200
  %1304 = vmatprep.subr.mxu0 %v1205
  %1305 = vmatpush1.msra.mxu0 %v1204
  %1306 = vmatprep.subr.mxu0 0.0
  %1307 = vmatpush1.msra.mxu0 0.0
  %1308 = vmatprep.subr.mxu0 0.0
  %1309 = vmatpush1.msra.mxu0 0.0
  %1310 = vmatprep.subr.mxu0 0.0
  %1311 = vmatpush1.msra.mxu0 0.0
  %1312 = vmatprep.subr.mxu0 0.0
  %1313 = vmatpush1.msra.mxu0 0.0
  %1314 = vmatprep.subr.mxu0 0.0
  %1315 = vmatpush1.msra.mxu0 0.0
  %1316 = vmatprep.subr.mxu0 0.0
  %1317 = vmatpush1.msra.mxu0 0.0
  %1318 = vmatprep.subr.mxu0 0.0
  %1319 = vmatpush1.msra.mxu0 0.0
  %1320 = vmatprep.subr.mxu0 0.0
  %1321 = vmatpush1.msra.mxu0 0.0
  %1322 = vmatprep.subr.mxu0 0.0
  %1323 = vmatpush1.msra.mxu0 0.0
  %1324 = vmatprep.subr.mxu0 0.0
  %1325 = vmatpush1.msra.mxu0 0.0
  %1326 = vmatprep.subr.mxu0 0.0
  %1327 = vmatpush1.msra.mxu0 0.0
  %1328 = vmatprep.subr.mxu0 0.0
  %1329 = vmatpush1.msra.mxu0 0.0
  %1330 = vmatprep.subr.mxu0 0.0
  %1331 = vmatpush1.msra.mxu0 0.0
  %1332 = vmatprep.subr.mxu0 0.0
  %1333 = vmatpush1.msra.mxu0 0.0
  %1334 = vmatprep.subr.mxu0 0.0
  %1335 = vmatpush1.msra.mxu0 0.0
  %1336 = vmatprep.subr.mxu0 0.0
  %1337 = vmatpush1.msra.mxu0 0.0
  %1338 = vmatprep.subr.mxu0 0.0
  %1339 = vmatpush1.msra.mxu0 0.0
  %1340 = vmatprep.subr.mxu0 0.0
  %1341 = vmatpush1.msra.mxu0 0.0
  %1342 = vmatprep.subr.mxu0 0.0
  %1343 = vmatpush1.msra.mxu0 0.0
  %1344 = vmatprep.subr.mxu0 0.0
  %1345 = vmatpush1.msra.mxu0 0.0
  %1346 = vmatprep.subr.mxu0 0.0
  %1347 = vmatpush1.msra.mxu0 0.0
  %1348 = vmatprep.subr.mxu0 0.0
  %1349 = vmatpush1.msra.mxu0 0.0
  %1350 = vmatprep.subr.mxu0 0.0
  %1351 = vmatpush1.msra.mxu0 0.0
  %1352 = vmatprep.subr.mxu0 0.0
  %1353 = vmatpush1.msra.mxu0 0.0
  %1354 = vmatprep.mubr.f32.mxu0 0.0
  %1355 = vmatmul.mubr.f32.gmra.mrb[0].mxu0 %v1208
  %v1356 = vpop.f32.mrb[0].mxu0
  %v1357 = vadd.f32 0.0, %v1356
  %v1358 = vpop.f32.mrb[0].mxu0
  %v1359 = vadd.f32 0.0, %v1358
  %1360 = vmatprep.mubr.f32.mxu0 0.0
  %1361 = vmatmul.mubr.f32.gmra.mrb[0].mxu0 %v1211
  %v1362 = vpop.f32.mrb[0].mxu0
  %v1363 = vadd.f32 0.0, %v1362
  %v1364 = vpop.f32.mrb[0].mxu0
  %v1365 = vadd.f32 0.0, %v1364
  %1366 = vdwg.mxu0
  %v1367 = vld [vmem:[%s6] sm:$0xff]
  %v1368 = vld [vmem:[%s6 + $0x8] sm:$0xff]
  %v1369 = vld [vmem:[%s6 + $0x10] sm:$0xff]
  %v1370 = vld [vmem:[%s6 + $0x18] sm:$0xff]
  %v1371 = vld [vmem:[%s6 + $0x20] sm:$0xff]
  %v1372 = vld [vmem:[%s6 + $0x28] sm:$0xff]
  %v1373 = vld [vmem:[%s6 + $0x30] sm:$0xff]
  %v1374 = vld [vmem:[%s6 + $0x38] sm:$0xff]
  %v1375 = vmul.f32 %v1280, %v1367
  %v1376 = vmul.f32 %v1282, %v1368
  %v1377 = vmul.f32 %v1357, %v1369
  %v1378 = vmul.f32 %v1359, %v1370
  %v1379 = vmul.f32 %v1286, %v1371
  %v1380 = vmul.f32 %v1288, %v1372
  %v1381 = vmul.f32 %v1363, %v1373
  %v1382 = vmul.f32 %v1365, %v1374
  %v1383 = vadd.f32 %v1375, %v1379
  %v1384 = vrot.slane %v1383, 4
  %v1385 = vadd.f32 %v1383, %v1384
  %v1386 = vrot.slane %v1385, 2
  %v1387 = vadd.f32 %v1385, %v1386
  %v1388 = vrot.slane %v1387, 1
  %v1389 = vadd.f32 %v1387, %v1388
  %v1390 = vadd.f32 %v1376, %v1380
  %v1391 = vrot.slane %v1390, 4
  %v1392 = vadd.f32 %v1390, %v1391
  %v1393 = vrot.slane %v1392, 2
  %v1394 = vadd.f32 %v1392, %v1393
  %v1395 = vrot.slane %v1394, 1
  %v1396 = vadd.f32 %v1394, %v1395
  %v1397 = vadd.f32 %v1377, %v1381
  %v1398 = vrot.slane %v1397, 4
  %v1399 = vadd.f32 %v1397, %v1398
  %v1400 = vrot.slane %v1399, 2
  %v1401 = vadd.f32 %v1399, %v1400
  %v1402 = vrot.slane %v1401, 1
  %v1403 = vadd.f32 %v1401, %v1402
  %v1404 = vadd.f32 %v1378, %v1382
  %v1405 = vrot.slane %v1404, 4
  %v1406 = vadd.f32 %v1404, %v1405
  %v1407 = vrot.slane %v1406, 2
  %v1408 = vadd.f32 %v1406, %v1407
  %v1409 = vrot.slane %v1408, 1
  %v1410 = vadd.f32 %v1408, %v1409
  %1411 = vrot.lane.b32.xlu0 %v1172, 64
  %v1412 = vpop.permute.xlu0 %1411
  %1413 = vrot.lane.b32.xlu0 %v1173, 64
  %v1414 = vpop.permute.xlu0 %1413
  %v1415 = vsel %vm1206, %v1412, 0
  %v1417 = vsel %vm1206, %v1414, 0
  %1419 = vmatprep.subr.mxu0 %v1175
  %1420 = vmatpush1.msra.mxu0 %v1174
  %1421 = vmatprep.subr.mxu0 %v1179
  %1422 = vmatpush1.msra.mxu0 %v1178
  %1423 = vmatprep.subr.mxu0 %v1183
  %1424 = vmatpush1.msra.mxu0 %v1182
  %1425 = vmatprep.subr.mxu0 %v1187
  %1426 = vmatpush1.msra.mxu0 %v1186
  %1427 = vmatprep.subr.mxu0 %v1191
  %1428 = vmatpush1.msra.mxu0 %v1190
  %1429 = vmatprep.subr.mxu0 %v1195
  %1430 = vmatpush1.msra.mxu0 %v1194
  %1431 = vmatprep.subr.mxu0 %v1199
  %1432 = vmatpush1.msra.mxu0 %v1198
  %1433 = vmatprep.subr.mxu0 %v1203
  %1434 = vmatpush1.msra.mxu0 %v1202
  %1435 = vmatprep.subr.mxu0 0.0
  %1436 = vmatpush1.msra.mxu0 0.0
  %1437 = vmatprep.subr.mxu0 0.0
  %1438 = vmatpush1.msra.mxu0 0.0
  %1439 = vmatprep.subr.mxu0 0.0
  %1440 = vmatpush1.msra.mxu0 0.0
  %1441 = vmatprep.subr.mxu0 0.0
  %1442 = vmatpush1.msra.mxu0 0.0
  %1443 = vmatprep.subr.mxu0 0.0
  %1444 = vmatpush1.msra.mxu0 0.0
  %1445 = vmatprep.subr.mxu0 0.0
  %1446 = vmatpush1.msra.mxu0 0.0
  %1447 = vmatprep.subr.mxu0 0.0
  %1448 = vmatpush1.msra.mxu0 0.0
  %1449 = vmatprep.subr.mxu0 0.0
  %1450 = vmatpush1.msra.mxu0 0.0
  %1451 = vmatprep.subr.mxu0 0.0
  %1452 = vmatpush1.msra.mxu0 0.0
  %1453 = vmatprep.subr.mxu0 0.0
  %1454 = vmatpush1.msra.mxu0 0.0
  %1455 = vmatprep.subr.mxu0 0.0
  %1456 = vmatpush1.msra.mxu0 0.0
  %1457 = vmatprep.subr.mxu0 0.0
  %1458 = vmatpush1.msra.mxu0 0.0
  %1459 = vmatprep.subr.mxu0 0.0
  %1460 = vmatpush1.msra.mxu0 0.0
  %1461 = vmatprep.subr.mxu0 0.0
  %1462 = vmatpush1.msra.mxu0 0.0
  %1463 = vmatprep.subr.mxu0 0.0
  %1464 = vmatpush1.msra.mxu0 0.0
  %1465 = vmatprep.subr.mxu0 0.0
  %1466 = vmatpush1.msra.mxu0 0.0
  %1467 = vmatprep.subr.mxu0 0.0
  %1468 = vmatpush1.msra.mxu0 0.0
  %1469 = vmatprep.subr.mxu0 0.0
  %1470 = vmatpush1.msra.mxu0 0.0
  %1471 = vmatprep.subr.mxu0 0.0
  %1472 = vmatpush1.msra.mxu0 0.0
  %1473 = vmatprep.subr.mxu0 0.0
  %1474 = vmatpush1.msra.mxu0 0.0
  %1475 = vmatprep.subr.mxu0 0.0
  %1476 = vmatpush1.msra.mxu0 0.0
  %1477 = vmatprep.subr.mxu0 0.0
  %1478 = vmatpush1.msra.mxu0 0.0
  %1479 = vmatprep.subr.mxu0 0.0
  %1480 = vmatpush1.msra.mxu0 0.0
  %1481 = vmatprep.subr.mxu0 0.0
  %1482 = vmatpush1.msra.mxu0 0.0
  %1483 = vmatprep.mubr.f32.mxu0 0.0
  %1484 = vmatmul.mubr.f32.gmra.mrb[0].mxu0 %v1415
  %v1485 = vpop.f32.mrb[0].mxu0
  %v1486 = vadd.f32 0.0, %v1485
  %v1487 = vpop.f32.mrb[0].mxu0
  %v1488 = vadd.f32 0.0, %v1487
  %1489 = vmatprep.mubr.f32.mxu0 0.0
  %1490 = vmatmul.mubr.f32.gmra.mrb[0].mxu0 %v1417
  %v1491 = vpop.f32.mrb[0].mxu0
  %v1492 = vadd.f32 0.0, %v1491
  %v1493 = vpop.f32.mrb[0].mxu0
  %v1494 = vadd.f32 0.0, %v1493
  %1495 = vdwg.mxu0
  %1496 = vmatprep.subr.mxu0 %v1177
  %1497 = vmatpush1.msra.mxu0 %v1176
  %1498 = vmatprep.subr.mxu0 %v1181
  %1499 = vmatpush1.msra.mxu0 %v1180
  %1500 = vmatprep.subr.mxu0 %v1185
  %1501 = vmatpush1.msra.mxu0 %v1184
  %1502 = vmatprep.subr.mxu0 %v1189
  %1503 = vmatpush1.msra.mxu0 %v1188
  %1504 = vmatprep.subr.mxu0 %v1193
  %1505 = vmatpush1.msra.mxu0 %v1192
  %1506 = vmatprep.subr.mxu0 %v1197
  %1507 = vmatpush1.msra.mxu0 %v1196
  %1508 = vmatprep.subr.mxu0 %v1201
  %1509 = vmatpush1.msra.mxu0 %v1200
  %1510 = vmatprep.subr.mxu0 %v1205
  %1511 = vmatpush1.msra.mxu0 %v1204
  %1512 = vmatprep.subr.mxu0 0.0
  %1513 = vmatpush1.msra.mxu0 0.0
  %1514 = vmatprep.subr.mxu0 0.0
  %1515 = vmatpush1.msra.mxu0 0.0
  %1516 = vmatprep.subr.mxu0 0.0
  %1517 = vmatpush1.msra.mxu0 0.0
  %1518 = vmatprep.subr.mxu0 0.0
  %1519 = vmatpush1.msra.mxu0 0.0
  %1520 = vmatprep.subr.mxu0 0.0
  %1521 = vmatpush1.msra.mxu0 0.0
  %1522 = vmatprep.subr.mxu0 0.0
  %1523 = vmatpush1.msra.mxu0 0.0
  %1524 = vmatprep.subr.mxu0 0.0
  %1525 = vmatpush1.msra.mxu0 0.0
  %1526 = vmatprep.subr.mxu0 0.0
  %1527 = vmatpush1.msra.mxu0 0.0
  %1528 = vmatprep.subr.mxu0 0.0
  %1529 = vmatpush1.msra.mxu0 0.0
  %1530 = vmatprep.subr.mxu0 0.0
  %1531 = vmatpush1.msra.mxu0 0.0
  %1532 = vmatprep.subr.mxu0 0.0
  %1533 = vmatpush1.msra.mxu0 0.0
  %1534 = vmatprep.subr.mxu0 0.0
  %1535 = vmatpush1.msra.mxu0 0.0
  %1536 = vmatprep.subr.mxu0 0.0
  %1537 = vmatpush1.msra.mxu0 0.0
  %1538 = vmatprep.subr.mxu0 0.0
  %1539 = vmatpush1.msra.mxu0 0.0
  %1540 = vmatprep.subr.mxu0 0.0
  %1541 = vmatpush1.msra.mxu0 0.0
  %1542 = vmatprep.subr.mxu0 0.0
  %1543 = vmatpush1.msra.mxu0 0.0
  %1544 = vmatprep.subr.mxu0 0.0
  %1545 = vmatpush1.msra.mxu0 0.0
  %1546 = vmatprep.subr.mxu0 0.0
  %1547 = vmatpush1.msra.mxu0 0.0
  %1548 = vmatprep.subr.mxu0 0.0
  %1549 = vmatpush1.msra.mxu0 0.0
  %1550 = vmatprep.subr.mxu0 0.0
  %1551 = vmatpush1.msra.mxu0 0.0
  %1552 = vmatprep.subr.mxu0 0.0
  %1553 = vmatpush1.msra.mxu0 0.0
  %1554 = vmatprep.subr.mxu0 0.0
  %1555 = vmatpush1.msra.mxu0 0.0
  %1556 = vmatprep.subr.mxu0 0.0
  %1557 = vmatpush1.msra.mxu0 0.0
  %1558 = vmatprep.subr.mxu0 0.0
  %1559 = vmatpush1.msra.mxu0 0.0
  %1560 = vmatprep.mubr.f32.mxu0 0.0
  %1561 = vmatmul.mubr.f32.gmra.mrb[0].mxu0 %v1415
  %v1562 = vpop.f32.mrb[0].mxu0
  %v1563 = vadd.f32 0.0, %v1562
  %v1564 = vpop.f32.mrb[0].mxu0
  %v1565 = vadd.f32 0.0, %v1564
  %1566 = vmatprep.mubr.f32.mxu0 0.0
  %1567 = vmatmul.mubr.f32.gmra.mrb[0].mxu0 %v1417
  %v1568 = vpop.f32.mrb[0].mxu0
  %v1569 = vadd.f32 0.0, %v1568
  %v1570 = vpop.f32.mrb[0].mxu0
  %v1571 = vadd.f32 0.0, %v1570
  %1572 = vdwg.mxu0
  %v1573 = vmul.f32 %v1486, %v1367
  %v1574 = vmul.f32 %v1488, %v1368
  %v1575 = vmul.f32 %v1563, %v1369
  %v1576 = vmul.f32 %v1565, %v1370
  %v1577 = vmul.f32 %v1492, %v1371
  %v1578 = vmul.f32 %v1494, %v1372
  %v1579 = vmul.f32 %v1569, %v1373
  %v1580 = vmul.f32 %v1571, %v1374
  %v1581 = vadd.f32 %v1573, %v1577
  %v1582 = vrot.slane %v1581, 4
  %v1583 = vadd.f32 %v1581, %v1582
  %v1584 = vrot.slane %v1583, 2
  %v1585 = vadd.f32 %v1583, %v1584
  %v1586 = vrot.slane %v1585, 1
  %v1587 = vadd.f32 %v1585, %v1586
  %v1588 = vadd.f32 %v1574, %v1578
  %v1589 = vrot.slane %v1588, 4
  %v1590 = vadd.f32 %v1588, %v1589
  %v1591 = vrot.slane %v1590, 2
  %v1592 = vadd.f32 %v1590, %v1591
  %v1593 = vrot.slane %v1592, 1
  %v1594 = vadd.f32 %v1592, %v1593
  %v1595 = vadd.f32 %v1575, %v1579
  %v1596 = vrot.slane %v1595, 4
  %v1597 = vadd.f32 %v1595, %v1596
  %v1598 = vrot.slane %v1597, 2
  %v1599 = vadd.f32 %v1597, %v1598
  %v1600 = vrot.slane %v1599, 1
  %v1601 = vadd.f32 %v1599, %v1600
  %v1602 = vadd.f32 %v1576, %v1580
  %v1603 = vrot.slane %v1602, 4
  %v1604 = vadd.f32 %v1602, %v1603
  %v1605 = vrot.slane %v1604, 2
  %v1606 = vadd.f32 %v1604, %v1605
  %v1607 = vrot.slane %v1606, 1
  %v1608 = vadd.f32 %v1606, %v1607
  %vm1609 = vcmask 1040384
  %v1610 = vsel %vm1609, %v1389, %v1587
  %v1611 = vsel %vm1609, %v1396, %v1594
  %v1612 = vsel %vm1609, %v1403, %v1601
  %v1613 = vsel %vm1609, %v1410, %v1608
  %v1614 = vld [vmem:[%s7] sm:$0xff]
  %v1615 = vld [vmem:[%s7 + $0x8] sm:$0xff]
  %v1616 = vld [vmem:[%s7 + $0x10] sm:$0xff]
  %v1617 = vld [vmem:[%s7 + $0x18] sm:$0xff]
  %v1618 = vld [vmem:[%s7 + $0x20] sm:$0xff]
  %v1619 = vld [vmem:[%s7 + $0x28] sm:$0xff]
  %v1620 = vld [vmem:[%s7 + $0x30] sm:$0xff]
  %v1621 = vld [vmem:[%s7 + $0x38] sm:$0xff]
  %v1622 = vld [vmem:[%s7 + $0x40] sm:$0xff]
  %v1623 = vld [vmem:[%s7 + $0x48] sm:$0xff]
  %v1624 = vld [vmem:[%s7 + $0x50] sm:$0xff]
  %v1625 = vld [vmem:[%s7 + $0x58] sm:$0xff]
  %v1626 = vld [vmem:[%s7 + $0x60] sm:$0xff]
  %v1627 = vld [vmem:[%s7 + $0x68] sm:$0xff]
  %v1628 = vld [vmem:[%s7 + $0x70] sm:$0xff]
  %v1629 = vld [vmem:[%s7 + $0x78] sm:$0xff]
  %v1630 = vld [vmem:[%s7 + $0x80] sm:$0xff]
  %v1631 = vld [vmem:[%s7 + $0x88] sm:$0xff]
  %v1632 = vld [vmem:[%s7 + $0x90] sm:$0xff]
  %v1633 = vld [vmem:[%s7 + $0x98] sm:$0xff]
  %v1634 = vld [vmem:[%s7 + $0xa0] sm:$0xff]
  %v1635 = vld [vmem:[%s7 + $0xa8] sm:$0xff]
  %v1636 = vld [vmem:[%s7 + $0xb0] sm:$0xff]
  %v1637 = vld [vmem:[%s7 + $0xb8] sm:$0xff]
  %v1638 = vld [vmem:[%s7 + $0xc0] sm:$0xff]
  %v1639 = vld [vmem:[%s7 + $0xc8] sm:$0xff]
  %v1640 = vld [vmem:[%s7 + $0xd0] sm:$0xff]
  %v1641 = vld [vmem:[%s7 + $0xd8] sm:$0xff]
  %v1642 = vld [vmem:[%s7 + $0xe0] sm:$0xff]
  %v1643 = vld [vmem:[%s7 + $0xe8] sm:$0xff]
  %v1644 = vld [vmem:[%s7 + $0xf0] sm:$0xff]
  %v1645 = vld [vmem:[%s7 + $0xf8] sm:$0xff]
  %v1646 = vld [vmem:[%s7 + $0x100] sm:$0xff]
  %v1647 = vld [vmem:[%s7 + $0x108] sm:$0xff]
  %v1648 = vld [vmem:[%s7 + $0x110] sm:$0xff]
  %v1649 = vld [vmem:[%s7 + $0x118] sm:$0xff]
  %v1650 = vld [vmem:[%s7 + $0x120] sm:$0xff]
  %v1651 = vld [vmem:[%s7 + $0x128] sm:$0xff]
  %v1652 = vld [vmem:[%s7 + $0x130] sm:$0xff]
  %v1653 = vld [vmem:[%s7 + $0x138] sm:$0xff]
  %v1654 = vld [vmem:[%s7 + $0x140] sm:$0xff]
  %v1655 = vld [vmem:[%s7 + $0x148] sm:$0xff]
  %v1656 = vld [vmem:[%s7 + $0x150] sm:$0xff]
  %v1657 = vld [vmem:[%s7 + $0x158] sm:$0xff]
  %v1658 = vld [vmem:[%s7 + $0x160] sm:$0xff]
  %v1659 = vld [vmem:[%s7 + $0x168] sm:$0xff]
  %v1660 = vld [vmem:[%s7 + $0x170] sm:$0xff]
  %v1661 = vld [vmem:[%s7 + $0x178] sm:$0xff]
  %v1662 = vld [vmem:[%s7 + $0x180] sm:$0xff]
  %v1663 = vld [vmem:[%s7 + $0x188] sm:$0xff]
  %v1664 = vld [vmem:[%s7 + $0x190] sm:$0xff]
  %v1665 = vld [vmem:[%s7 + $0x198] sm:$0xff]
  %v1666 = vld [vmem:[%s7 + $0x1a0] sm:$0xff]
  %v1667 = vld [vmem:[%s7 + $0x1a8] sm:$0xff]
  %v1668 = vld [vmem:[%s7 + $0x1b0] sm:$0xff]
  %v1669 = vld [vmem:[%s7 + $0x1b8] sm:$0xff]
  %v1670 = vld [vmem:[%s7 + $0x1c0] sm:$0xff]
  %v1671 = vld [vmem:[%s7 + $0x1c8] sm:$0xff]
  %v1672 = vld [vmem:[%s7 + $0x1d0] sm:$0xff]
  %v1673 = vld [vmem:[%s7 + $0x1d8] sm:$0xff]
  %v1674 = vld [vmem:[%s7 + $0x1e0] sm:$0xff]
  %v1675 = vld [vmem:[%s7 + $0x1e8] sm:$0xff]
  %v1676 = vld [vmem:[%s7 + $0x1f0] sm:$0xff]
  %v1677 = vld [vmem:[%s7 + $0x1f8] sm:$0xff]
  %1678 = vmatprep.subr.mxu0 0.0
  %1679 = vmatpush1.msra.mxu0 %v1614
  %1680 = vmatprep.subr.mxu0 0.0
  %1681 = vmatpush1.msra.mxu0 %v1615
  %1682 = vmatprep.subr.mxu0 0.0
  %1683 = vmatpush1.msra.mxu0 %v1616
  %1684 = vmatprep.subr.mxu0 0.0
  %1685 = vmatpush1.msra.mxu0 %v1617
  %1686 = vmatprep.subr.mxu0 0.0
  %1687 = vmatpush1.msra.mxu0 %v1618
  %1688 = vmatprep.subr.mxu0 0.0
  %1689 = vmatpush1.msra.mxu0 %v1619
  %1690 = vmatprep.subr.mxu0 0.0
  %1691 = vmatpush1.msra.mxu0 %v1620
  %1692 = vmatprep.subr.mxu0 0.0
  %1693 = vmatpush1.msra.mxu0 %v1621
  %1694 = vmatprep.subr.mxu0 0.0
  %1695 = vmatpush1.msra.mxu0 %v1622
  %1696 = vmatprep.subr.mxu0 0.0
  %1697 = vmatpush1.msra.mxu0 %v1623
  %1698 = vmatprep.subr.mxu0 0.0
  %1699 = vmatpush1.msra.mxu0 %v1624
  %1700 = vmatprep.subr.mxu0 0.0
  %1701 = vmatpush1.msra.mxu0 %v1625
  %1702 = vmatprep.subr.mxu0 0.0
  %1703 = vmatpush1.msra.mxu0 %v1626
  %1704 = vmatprep.subr.mxu0 0.0
  %1705 = vmatpush1.msra.mxu0 %v1627
  %1706 = vmatprep.subr.mxu0 0.0
  %1707 = vmatpush1.msra.mxu0 %v1628
  %1708 = vmatprep.subr.mxu0 0.0
  %1709 = vmatpush1.msra.mxu0 %v1629
  %1710 = vmatprep.subr.mxu0 0.0
  %1711 = vmatpush1.msra.mxu0 %v1630
  %1712 = vmatprep.subr.mxu0 0.0
  %1713 = vmatpush1.msra.mxu0 %v1631
  %1714 = vmatprep.subr.mxu0 0.0
  %1715 = vmatpush1.msra.mxu0 %v1632
  %1716 = vmatprep.subr.mxu0 0.0
  %1717 = vmatpush1.msra.mxu0 %v1633
  %1718 = vmatprep.subr.mxu0 0.0
  %1719 = vmatpush1.msra.mxu0 %v1634
  %1720 = vmatprep.subr.mxu0 0.0
  %1721 = vmatpush1.msra.mxu0 %v1635
  %1722 = vmatprep.subr.mxu0 0.0
  %1723 = vmatpush1.msra.mxu0 %v1636
  %1724 = vmatprep.subr.mxu0 0.0
  %1725 = vmatpush1.msra.mxu0 %v1637
  %1726 = vmatprep.subr.mxu0 0.0
  %1727 = vmatpush1.msra.mxu0 %v1638
  %1728 = vmatprep.subr.mxu0 0.0
  %1729 = vmatpush1.msra.mxu0 %v1639
  %1730 = vmatprep.subr.mxu0 0.0
  %1731 = vmatpush1.msra.mxu0 %v1640
  %1732 = vmatprep.subr.mxu0 0.0
  %1733 = vmatpush1.msra.mxu0 %v1641
  %1734 = vmatprep.subr.mxu0 0.0
  %1735 = vmatpush1.msra.mxu0 %v1642
  %1736 = vmatprep.subr.mxu0 0.0
  %1737 = vmatpush1.msra.mxu0 %v1643
  %1738 = vmatprep.subr.mxu0 0.0
  %1739 = vmatpush1.msra.mxu0 %v1644
  %1740 = vmatprep.subr.mxu0 0.0
  %1741 = vmatpush1.msra.mxu0 %v1645
  %1742 = vmatprep.mubr.f32.mxu0 %v1611
  %1743 = vmatmul.mubr.f32.gmra.mrb[0].mxu0 %v1610
  %v1744 = vpop.f32.mrb[0].mxu0
  %v1745 = vadd.f32 0.0, %v1744
  %v1746 = vpop.f32.mrb[0].mxu0
  %1747 = vdwg.mxu0
  %1748 = vmatprep.subr.mxu0 0.0
  %1749 = vmatpush1.msra.mxu0 %v1646
  %1750 = vmatprep.subr.mxu0 0.0
  %1751 = vmatpush1.msra.mxu0 %v1647
  %1752 = vmatprep.subr.mxu0 0.0
  %1753 = vmatpush1.msra.mxu0 %v1648
  %1754 = vmatprep.subr.mxu0 0.0
  %1755 = vmatpush1.msra.mxu0 %v1649
  %1756 = vmatprep.subr.mxu0 0.0
  %1757 = vmatpush1.msra.mxu0 %v1650
  %1758 = vmatprep.subr.mxu0 0.0
  %1759 = vmatpush1.msra.mxu0 %v1651
  %1760 = vmatprep.subr.mxu0 0.0
  %1761 = vmatpush1.msra.mxu0 %v1652
  %1762 = vmatprep.subr.mxu0 0.0
  %1763 = vmatpush1.msra.mxu0 %v1653
  %1764 = vmatprep.subr.mxu0 0.0
  %1765 = vmatpush1.msra.mxu0 %v1654
  %1766 = vmatprep.subr.mxu0 0.0
  %1767 = vmatpush1.msra.mxu0 %v1655
  %1768 = vmatprep.subr.mxu0 0.0
  %1769 = vmatpush1.msra.mxu0 %v1656
  %1770 = vmatprep.subr.mxu0 0.0
  %1771 = vmatpush1.msra.mxu0 %v1657
  %1772 = vmatprep.subr.mxu0 0.0
  %1773 = vmatpush1.msra.mxu0 %v1658
  %1774 = vmatprep.subr.mxu0 0.0
  %1775 = vmatpush1.msra.mxu0 %v1659
  %1776 = vmatprep.subr.mxu0 0.0
  %1777 = vmatpush1.msra.mxu0 %v1660
  %1778 = vmatprep.subr.mxu0 0.0
  %1779 = vmatpush1.msra.mxu0 %v1661
  %1780 = vmatprep.subr.mxu0 0.0
  %1781 = vmatpush1.msra.mxu0 %v1662
  %1782 = vmatprep.subr.mxu0 0.0
  %1783 = vmatpush1.msra.mxu0 %v1663
  %1784 = vmatprep.subr.mxu0 0.0
  %1785 = vmatpush1.msra.mxu0 %v1664
  %1786 = vmatprep.subr.mxu0 0.0
  %1787 = vmatpush1.msra.mxu0 %v1665
  %1788 = vmatprep.subr.mxu0 0.0
  %1789 = vmatpush1.msra.mxu0 %v1666
  %1790 = vmatprep.subr.mxu0 0.0
  %1791 = vmatpush1.msra.mxu0 %v1667
  %1792 = vmatprep.subr.mxu0 0.0
  %1793 = vmatpush1.msra.mxu0 %v1668
  %1794 = vmatprep.subr.mxu0 0.0
  %1795 = vmatpush1.msra.mxu0 %v1669
  %1796 = vmatprep.subr.mxu0 0.0
  %1797 = vmatpush1.msra.mxu0 %v1670
  %1798 = vmatprep.subr.mxu0 0.0
  %1799 = vmatpush1.msra.mxu0 %v1671
  %1800 = vmatprep.subr.mxu0 0.0
  %1801 = vmatpush1.msra.mxu0 %v1672
  %1802 = vmatprep.subr.mxu0 0.0
  %1803 = vmatpush1.msra.mxu0 %v1673
  %1804 = vmatprep.subr.mxu0 0.0
  %1805 = vmatpush1.msra.mxu0 %v1674
  %1806 = vmatprep.subr.mxu0 0.0
  %1807 = vmatpush1.msra.mxu0 %v1675
  %1808 = vmatprep.subr.mxu0 0.0
  %1809 = vmatpush1.msra.mxu0 %v1676
  %1810 = vmatprep.subr.mxu0 0.0
  %1811 = vmatpush1.msra.mxu0 %v1677
  %1812 = vmatprep.mubr.f32.mxu0 %v1613
  %1813 = vmatmul.mubr.f32.gmra.mrb[0].mxu0 %v1612
  %v1814 = vpop.f32.mrb[0].mxu0
  %v1815 = vadd.f32 %v1745, %v1814
  %v1816 = vpop.f32.mrb[0].mxu0
  %1817 = vdwg.mxu0
  %vm1818 = vcmask 254976
  %v1819 = vsel %vm1818, %v1815, 0.0
  %v1820 = vrot.slane %v1819, 4
  %v1821 = vadd.f32 %v1819, %v1820
  %v1822 = vrot.slane %v1821, 2
  %v1823 = vadd.f32 %v1821, %v1822
  %v1824 = vrot.slane %v1823, 1
  %v1825 = vadd.f32 %v1823, %v1824
  %v1826 = vrcp.pop 2.0
  %v1827 = vmul.f32 %v1825, %v1826
  %v1828 = vsub.f32 %v1815, %v1827
  %v1829 = vmul.f32 %v1828, %v1828
  %v1830 = vsel %vm1818, %v1829, 0.0
  %v1831 = vrot.slane %v1830, 4
  %v1832 = vadd.f32 %v1830, %v1831
  %v1833 = vrot.slane %v1832, 2
  %v1834 = vadd.f32 %v1832, %v1833
  %v1835 = vrot.slane %v1834, 1
  %v1836 = vadd.f32 %v1834, %v1835
  %v1837 = vmul.f32 %v1836, %v1826
  %v1838 = vadd.f32 %v1837, 1e-05
  %v1839 = vrsqrt.pop %v1838
  %v1840 = vmul.f32 %v1828, %v1839
  %v1841 = vld [vmem:[%s8] sm:$0x1]
  %v1843 = vlaneseq
  %v1844 = vshrl.u32 %v1843, 7
  %v1845 = vsub.s32 0, %v1844
  %v1846 = vrot.slane %v1841, %v1845
  %v1848 = vmul.f32 %v1840, %v1846
  %v1849 = vld [vmem:[%s9] sm:$0x1]
  %v1851 = vlaneseq
  %v1852 = vshrl.u32 %v1851, 7
  %v1853 = vsub.s32 0, %v1852
  %v1854 = vrot.slane %v1849, %v1853
  %v1856 = vadd.f32 %v1848, %v1854
  %v1857 = vld [vmem:[%s10] sm:$0x1]
  %v1859 = vlaneseq
  %v1860 = vshrl.u32 %v1859, 7
  %v1861 = vsub.s32 0, %v1860
  %v1862 = vrot.slane %v1857, %v1861
  %v1864 = vmul.f32 %v1856, %v1862
  %v1865 = vsel %vm1818, %v1864, 0.0
  %1866 = vadd.xlane.f32.xlu0 %v1865
  %v1867 = vpop.xlane.xlu0 %1866
  %v1868 = vld [vmem:[#allocation2] sm:$0x1]
  %v1870 = vlaneseq
  %v1871 = vshrl.u32 %v1870, 7
  %v1872 = vsub.s32 0, %v1871
  %v1873 = vrot.slane %v1868, %v1872
  %v1875 = vadd.f32 %v1867, %v1873
  %v1876 = vsub.f32 0.0, %v1875
  %v1877 = vmul.f32 %v1876, 1.442695
  %v1878 = vpow.pop %v1877
  %v1879 = vadd.f32 %v1878, 1.0
  %v1880 = vrcp.pop %v1879
  %v1881 = vmul.f32 1.0, %v1880
  %vm1882 = vcmask 1024
  %1883 = vst.msk [vmem:[%s12] sm:$0x3] %vm1882, %v1881
  // Predicated region
  $region50: #{forward.1} parent=0 // pred_check
    _
  $region51: #{forward.1} parent=0 // pred_check_branch
    %1885 = sbr.rel (0) target = $region53
  $region52: #{forward.1} parent=0 // pred_region
    _
  $region53: #{forward.1} parent=0 // pred_fallthru
    _
  // Predicated region
  $region54: #{forward.1} parent=0 // pred_check
    _
  $region55: #{forward.1} parent=0 // pred_check_branch
    %1887 = sbr.rel (0) target = $region57
  $region56: #{forward.1} parent=0 // pred_region
    _
  $region57: #{forward.1} parent=0 // pred_fallthru
    _

</llo_original>
